<compile_context>
chip_gen: v6e
topology: v6e:2x2x1
jax: 0.10.0
libtpu: 0.0.40
codegen_flags: <defaults>
</compile_context>

<pallas_src>
import functools

import jax
import jax.numpy as jnp
from jax.experimental import pallas as pl
from jax.experimental.pallas import tpu as pltpu


# -----------------------------------------------------------------------------
# Synthetic model dimensions
# -----------------------------------------------------------------------------
F_MEL = 32      # audio mel bins
CA = 8          # audio feature channels
CI = 8          # identity feature channels
D = 16          # shared feature width (last dim)
T = 16          # audio time frames  -> repeat factor 16 on image path
H = 8           # identity rows      -> repeat factor 8 on audio path
H_A = 64        # audio hidden width
H_D = 32        # decoder hidden width
K_ID = 3 * 8    # identity projection input width (24)
K_ID_PAD = 32   # padded to 32 for friendlier K tiling
W1E = H_D * D   # 512 : expanded decoder hidden width
NOUT = 3 * D    # 48  : expanded decoder output width


def init_params(key):
    ks = jax.random.split(key, 10)
    s = 0.1
    return {
        # AudioEncoderGen: per-frame MLP  F_MEL -> H_A -> CA*D
        "a_w1": s * jax.random.normal(ks[0], (F_MEL, H_A), jnp.float32),
        "a_b1": jnp.zeros((H_A,), jnp.float32),
        "a_w2": s * jax.random.normal(ks[1], (H_A, CA * D), jnp.float32),
        "a_b2": jnp.zeros((CA * D,), jnp.float32),
        # IdentityEncoder: per-row MLP  (3*8) -> CI*D
        "i_w1": s * jax.random.normal(ks[2], (K_ID, CI * D), jnp.float32),
        "i_b1": jnp.zeros((CI * D,), jnp.float32),
        # ImagesDecoder: per-voxel (1x1x1 conv) MLP  (CA+CI) -> H_D -> 3
        "d_w1": s * jax.random.normal(ks[3], (CA + CI, H_D), jnp.float32),
        "d_b1": jnp.zeros((H_D,), jnp.float32),
        "d_w2": s * jax.random.normal(ks[4], (H_D, 3), jnp.float32),
        "d_b2": jnp.zeros((3,), jnp.float32),
    }


# -----------------------------------------------------------------------------
# One-time weight preparation (hoisted out of the per-call forward path)
# -----------------------------------------------------------------------------
def prepare_params(params):
    f32, bf16 = jnp.float32, jnp.bfloat16
    eye_d = jnp.eye(D, dtype=f32)

    # Kronecker expansion of the per-voxel decoder weights:
    #   Wa[(c,d_in),(k,d_out)]  = d_w1[c, k]    * delta(d_in, d_out)
    #   Wb[(c,d_in),(k,d_out)]  = d_w1[CA+c, k] * delta(d_in, d_out)
    #   W2e[(k,d_in),(n,d_out)] = d_w2[k, n]    * delta(d_in, d_out)
    wa = jnp.einsum("ck,de->cdke", params["d_w1"][:CA], eye_d).reshape(CA * D, W1E)
    wb = jnp.einsum("ck,de->cdke", params["d_w1"][CA:], eye_d).reshape(CI * D, W1E)
    w2e = jnp.einsum("kn,de->kdne", params["d_w2"], eye_d).reshape(W1E, NOUT)

    # All five tiny biases packed into one (8, 512) f32 slab (single DMA).
    bias = jnp.zeros((8, W1E), f32)
    bias = bias.at[0, :H_A].set(params["a_b1"])
    bias = bias.at[1, :CA * D].set(params["a_b2"])
    bias = bias.at[2, :CI * D].set(params["i_b1"])
    bias = bias.at[3, :].set(jnp.repeat(params["d_b1"], D))
    bias = bias.at[4, :NOUT].set(jnp.repeat(params["d_b2"], D))

    return {
        "a_w1": params["a_w1"].astype(bf16),                                   # (32, 64)
        "a_w2": params["a_w2"].astype(bf16),                                   # (64, 128)
        "i_w1": jnp.pad(params["i_w1"],
                        ((0, K_ID_PAD - K_ID), (0, 0))).astype(bf16),          # (32, 128)
        "wa": wa.astype(bf16),                                                 # (128, 512)
        "wb": wb.astype(bf16),                                                 # (128, 512)
        "w2e": w2e.astype(bf16),                                               # (512, 48)
        "bias": bias,                                                          # (8, 512) f32
    }


# -----------------------------------------------------------------------------
# Fused Generator kernel: single grid step, batch folded into the sublane dim.
# -----------------------------------------------------------------------------
def _generator_kernel(
    audio_ref, rows_ref,                       # activations (B*T, F), (B*H, 32)   bf16
    a_w1_ref, a_w2_ref, i_w1_ref,              # encoder weights                   bf16
    wa_ref, wb_ref, w2e_ref,                   # expanded decoder weights          bf16
    bias_ref,                                  # packed biases (8, 512)            f32
    afeat_ref, dec_ref,                        # outputs
    *, batch,
):
    f32, bf16 = jnp.float32, jnp.bfloat16
    bt = batch * T
    n_vox = batch * T * H

    bias = bias_ref[...]                       # (8, 512) f32
    a_b1 = bias[0:1, :H_A]
    a_b2 = bias[1:2, :CA * D]
    i_b1 = bias[2:3, :CI * D]
    b1e = bias[3:4, :]
    b2e = bias[4:5, :NOUT]

    # ---- AudioEncoderGen: fused 2-layer per-frame MLP (bf16 MXU, f32 acc) ----
    h1 = jnp.dot(audio_ref[...], a_w1_ref[...], preferred_element_type=f32) + a_b1
    h1 = jnp.maximum(h1, 0.0)                                       # (B*T, 64)
    a_feat = jnp.dot(h1.astype(bf16), a_w2_ref[...],
                     preferred_element_type=f32) + a_b2
    a_feat = jnp.maximum(a_feat, 0.0)                               # (B*T, 128)
    afeat_ref[...] = a_feat                                         # lane-dense store

    # ---- IdentityEncoder: per-row projection ----
    i_feat = jnp.dot(rows_ref[...], i_w1_ref[...],
                     preferred_element_type=f32) + i_b1
    i_feat = jnp.maximum(i_feat, 0.0)                               # (B*H, 128)

    # ---- ImagesDecoder layer 1 (1x1x1 conv) on Kronecker-expanded weights ----
    # hid_a[(b,t), k*D+d] = sum_c d_w1[c, k]    * audio_feat[b, c, t, d]
    # hid_b[(b,h), k*D+d] = sum_c d_w1[CA+c, k] * image_feat[b, c, h, d]
    hid_a = jnp.dot(a_feat.astype(bf16), wa_ref[...],
                    preferred_element_type=f32)                     # (B*T, 512)
    hid_b = jnp.dot(i_feat.astype(bf16), wb_ref[...],
                    preferred_element_type=f32)                     # (B*H, 512)

    # unsqueeze/repeat/cat glue: sublane / major-dim broadcasts (off the MXU).
    # Target layout: row index = ((b*T + t)*H + h).
    hid_a_rep = jnp.broadcast_to(hid_a[:, None, :],
                                 (bt, H, W1E)).reshape(n_vox, W1E)
    hid_b_rep = jnp.broadcast_to(hid_b.reshape(batch, 1, H, W1E),
                                 (batch, T, H, W1E)).reshape(n_vox, W1E)

    # Early bf16 cast of hid to relieve vreg/spill pressure before the matmul.
    hid = jnp.maximum(hid_a_rep + hid_b_rep + b1e, 0.0).astype(bf16)  # (256, 512)

    # ---- Decoder layer 2 + tanh; lane-packed (B*T*H, 3*D) output ----
    out = jnp.dot(hid, w2e_ref[...], preferred_element_type=f32) + b2e  # (256, 48)
    dec_ref[...] = jnp.tanh(out)


# -----------------------------------------------------------------------------
# Wrapper: input layout glue (tiny tensors) + single single-step pallas_call
# -----------------------------------------------------------------------------
def generator_forward(prepped, audio, image):
    B = audio.shape[0]
    f32, bf16 = jnp.float32, jnp.bfloat16

    # per-batch inputs, batch folded into rows; pre-cast to bf16 (half the DMA)
    audio2d = audio.reshape(B * T, F_MEL).astype(bf16)                        # (B*T, 32)
    pooled = image.astype(f32).reshape(B, 3, H, 2, H, 2).mean(axis=(3, 5))    # (B,3,8,8)
    rows = pooled.transpose(0, 2, 1, 3).reshape(B * H, K_ID)                  # (B*H, 24)
    rows = jnp.pad(rows, ((0, 0), (0, K_ID_PAD - K_ID))).astype(bf16)         # (B*H, 32)

    def spec(shape):
        return pl.BlockSpec(shape, lambda i: (0, 0))

    afeat_rows, dec_rows = pl.pallas_call(
        functools.partial(_generator_kernel, batch=B),
        out_shape=(
            jax.ShapeDtypeStruct((B * T, CA * D), f32),       # audio feature slab
            jax.ShapeDtypeStruct((B * T * H, NOUT), f32),     # decoded slab
        ),
        grid=(1,),
        in_specs=[
            spec((B * T, F_MEL)),
            spec((B * H, K_ID_PAD)),
            spec((F_MEL, H_A)),
            spec((H_A, CA * D)),
            spec((K_ID_PAD, CI * D)),
            spec((CA * D, W1E)),
            spec((CI * D, W1E)),
            spec((W1E, NOUT)),
            spec((8, W1E)),
        ],
        out_specs=(
            spec((B * T, CA * D)),
            spec((B * T * H, NOUT)),
        ),
        compiler_params=pltpu.CompilerParams(
            dimension_semantics=("arbitrary",)),
    )(audio2d, rows,
      prepped["a_w1"], prepped["a_w2"], prepped["i_w1"],
      prepped["wa"], prepped["wb"], prepped["w2e"], prepped["bias"])

    # Cheap wrapper-side relayout of the lane-packed kernel outputs.
    audio_feat = afeat_rows.reshape(B, T, CA, D).transpose(0, 2, 1, 3)        # (B,CA,T,D)
    decoded = dec_rows.reshape(B, T, H, 3, D).transpose(0, 3, 1, 2, 4)        # (B,3,T,H,D)
    return decoded, audio_feat


# -----------------------------------------------------------------------------
# Pure-JAX f32 reference (mirrors the torch Generator.forward glue exactly)
# -----------------------------------------------------------------------------
def _reference_forward(params, audio, image):
    B = audio.shape[0]
    a = audio.reshape(B * T, F_MEL)
    a = jnp.maximum(a @ params["a_w1"] + params["a_b1"], 0.0)
    a = jnp.maximum(a @ params["a_w2"] + params["a_b2"], 0.0)
    audio_feat = a.reshape(B, T, CA, D).transpose(0, 2, 1, 3)                 # (B,CA,T,D)

    pooled = image.reshape(B, 3, H, 2, H, 2).mean(axis=(3, 5))                # (B,3,8,8)
    rows = pooled.transpose(0, 2, 1, 3).reshape(B * H, K_ID)
    i = jnp.maximum(rows @ params["i_w1"] + params["i_b1"], 0.0)
    image_feat = i.reshape(B, H, CI, D).transpose(0, 2, 1, 3)                 # (B,CI,H,D)

    audio_ext = jnp.broadcast_to(audio_feat[:, :, :, None, :], (B, CA, T, H, D))
    image_ext = jnp.broadcast_to(image_feat[:, :, None, :, :], (B, CI, T, H, D))
    feature = jnp.concatenate([audio_ext, image_ext], axis=1)                 # (B,16,T,H,D)

    C = CA + CI
    f = feature.transpose(0, 2, 3, 4, 1).reshape(-1, C)
    d1 = jnp.maximum(f @ params["d_w1"] + params["d_b1"], 0.0)
    d2 = jnp.tanh(d1 @ params["d_w2"] + params["d_b2"])
    decoded = d2.reshape(B, T, H, D, 3).transpose(0, 4, 1, 2, 3)              # (B,3,T,H,D)
    return decoded, audio_feat


# -----------------------------------------------------------------------------
if __name__ == "__main__":
    key = jax.random.PRNGKey(0)
    kp, ka, ki = jax.random.split(key, 3)

    params = init_params(kp)
    audio = jax.random.normal(ka, (2, 1, T, F_MEL), jnp.float32)   # (2,1,16,32)
    image = jax.random.normal(ki, (2, 3, 16, 16), jnp.float32)     # (2,3,16,16)

    # One-time weight expansion, outside the jitted per-call forward.
    prepped = prepare_params(params)
    jax.block_until_ready(prepped)

    fwd = jax.jit(generator_forward)
    decoded, audio_feat = fwd(prepped, audio, image)
    jax.block_until_ready((decoded, audio_feat))

    assert decoded.shape == (2, 3, T, H, D), decoded.shape
    assert audio_feat.shape == (2, CA, T, D), audio_feat.shape

    # Numerical sanity check vs. pure-JAX f32 reference (bf16 MXU operands).
    ref_dec, ref_af = jax.jit(_reference_forward)(params, audio, image)
    assert float(jnp.max(jnp.abs(decoded - ref_dec))) < 5e-2
    assert float(jnp.max(jnp.abs(audio_feat - ref_af))) < 5e-2
    assert float(jnp.mean(jnp.abs(decoded - ref_dec))) < 5e-3
    assert float(jnp.mean(jnp.abs(audio_feat - ref_af))) < 5e-3

    print("KERNEL_OK")
</pallas_src>

<mosaic_0001>
module attributes {stable_mosaic.version = 11 : i64} {
  func.func @_generator_kernel(%arg0: i32, %arg1: memref<32x32xbf16, #tpu.memory_space<vmem>>, %arg2: memref<16x32xbf16, #tpu.memory_space<vmem>>, %arg3: memref<32x64xbf16, #tpu.memory_space<vmem>>, %arg4: memref<64x128xbf16, #tpu.memory_space<vmem>>, %arg5: memref<32x128xbf16, #tpu.memory_space<vmem>>, %arg6: memref<128x512xbf16, #tpu.memory_space<vmem>>, %arg7: memref<128x512xbf16, #tpu.memory_space<vmem>>, %arg8: memref<512x48xbf16, #tpu.memory_space<vmem>>, %arg9: memref<8x512xf32, #tpu.memory_space<vmem>>, %arg10: memref<32x128xf32, #tpu.memory_space<vmem>>, %arg11: memref<256x48xf32, #tpu.memory_space<vmem>>) attributes {dimension_semantics = [#tpu.dimension_semantics<arbitrary>], iteration_bounds = array<i64: 1>, scalar_prefetch = 0 : i64, scratch_operands = 0 : i64, tpu.core_type = #tpu.core_type<tc>, window_params = [{pipeline_mode = #tpu.pipeline_mode<synchronous>, transform_indices = @transform_0, window_bounds = array<i64: 32, 32>}, {pipeline_mode = #tpu.pipeline_mode<synchronous>, transform_indices = @transform_1, window_bounds = array<i64: 16, 32>}, {pipeline_mode = #tpu.pipeline_mode<synchronous>, transform_indices = @transform_2, window_bounds = array<i64: 32, 64>}, {pipeline_mode = #tpu.pipeline_mode<synchronous>, transform_indices = @transform_3, window_bounds = array<i64: 64, 128>}, {pipeline_mode = #tpu.pipeline_mode<synchronous>, transform_indices = @transform_4, window_bounds = array<i64: 32, 128>}, {pipeline_mode = #tpu.pipeline_mode<synchronous>, transform_indices = @transform_5, window_bounds = array<i64: 128, 512>}, {pipeline_mode = #tpu.pipeline_mode<synchronous>, transform_indices = @transform_6, window_bounds = array<i64: 128, 512>}, {pipeline_mode = #tpu.pipeline_mode<synchronous>, transform_indices = @transform_7, window_bounds = array<i64: 512, 48>}, {pipeline_mode = #tpu.pipeline_mode<synchronous>, transform_indices = @transform_8, window_bounds = array<i64: 8, 512>}, {pipeline_mode = #tpu.pipeline_mode<synchronous>, transform_indices = @transform_9, window_bounds = array<i64: 32, 128>}, {pipeline_mode = #tpu.pipeline_mode<synchronous>, transform_indices = @transform_10, window_bounds = array<i64: 256, 48>}]} {
    %c0 = arith.constant 0 : index
    %c0_0 = arith.constant 0 : index
    %0 = vector.load %arg9[%c0, %c0_0] : memref<8x512xf32, #tpu.memory_space<vmem>>, vector<8x512xf32>
    %1 = vector.extract_strided_slice %0 {offsets = [0, 0], sizes = [1, 64], strides = [1, 1]} : vector<8x512xf32> to vector<1x64xf32>
    %2 = vector.extract_strided_slice %0 {offsets = [1, 0], sizes = [1, 128], strides = [1, 1]} : vector<8x512xf32> to vector<1x128xf32>
    %3 = vector.extract_strided_slice %0 {offsets = [2, 0], sizes = [1, 128], strides = [1, 1]} : vector<8x512xf32> to vector<1x128xf32>
    %4 = vector.extract_strided_slice %0 {offsets = [3, 0], sizes = [1, 512], strides = [1, 1]} : vector<8x512xf32> to vector<1x512xf32>
    %5 = vector.extract_strided_slice %0 {offsets = [4, 0], sizes = [1, 48], strides = [1, 1]} : vector<8x512xf32> to vector<1x48xf32>
    %c0_1 = arith.constant 0 : index
    %c0_2 = arith.constant 0 : index
    %6 = vector.load %arg1[%c0_1, %c0_2] : memref<32x32xbf16, #tpu.memory_space<vmem>>, vector<32x32xbf16>
    %c0_3 = arith.constant 0 : index
    %c0_4 = arith.constant 0 : index
    %7 = vector.load %arg3[%c0_3, %c0_4] : memref<32x64xbf16, #tpu.memory_space<vmem>>, vector<32x64xbf16>
    %cst = arith.constant dense<0.000000e+00> : vector<32x64xf32>
    %8 = tpu.matmul %6, %7, %cst {dimension_numbers = #tpu.dot_dimension_numbers<[1], [0], [0], [1], [0, 0, 1, 1], [], []>} : vector<32x32xbf16>, vector<32x64xbf16>, vector<32x64xf32> -> vector<32x64xf32>
    %9 = vector.broadcast %1 : vector<1x64xf32> to vector<32x64xf32>
    %10 = arith.addf %8, %9 : vector<32x64xf32>
    %cst_5 = arith.constant 0.000000e+00 : f32
    %11 = vector.broadcast %cst_5 : f32 to vector<32x64xf32>
    %12 = arith.maximumf %10, %11 : vector<32x64xf32>
    %13 = arith.truncf %12 : vector<32x64xf32> to vector<32x64xbf16>
    %c0_6 = arith.constant 0 : index
    %c0_7 = arith.constant 0 : index
    %14 = vector.load %arg4[%c0_6, %c0_7] : memref<64x128xbf16, #tpu.memory_space<vmem>>, vector<64x128xbf16>
    %cst_8 = arith.constant dense<0.000000e+00> : vector<32x128xf32>
    %15 = tpu.matmul %13, %14, %cst_8 {dimension_numbers = #tpu.dot_dimension_numbers<[1], [0], [0], [1], [0, 0, 1, 1], [], []>} : vector<32x64xbf16>, vector<64x128xbf16>, vector<32x128xf32> -> vector<32x128xf32>
    %16 = vector.broadcast %2 : vector<1x128xf32> to vector<32x128xf32>
    %17 = arith.addf %15, %16 : vector<32x128xf32>
    %cst_9 = arith.constant 0.000000e+00 : f32
    %18 = vector.broadcast %cst_9 : f32 to vector<32x128xf32>
    %19 = arith.maximumf %17, %18 : vector<32x128xf32>
    %c0_10 = arith.constant 0 : index
    %c0_11 = arith.constant 0 : index
    %20 = vector.load %arg10[%c0_10, %c0_11] : memref<32x128xf32, #tpu.memory_space<vmem>>, vector<32x128xf32>
    tpu.vector_store %arg10[%c0_10, %c0_11], %19 {strides = array<i32>} : memref<32x128xf32, #tpu.memory_space<vmem>>, vector<32x128xf32>,
    %c0_12 = arith.constant 0 : index
    %c0_13 = arith.constant 0 : index
    %21 = vector.load %arg2[%c0_12, %c0_13] : memref<16x32xbf16, #tpu.memory_space<vmem>>, vector<16x32xbf16>
    %c0_14 = arith.constant 0 : index
    %c0_15 = arith.constant 0 : index
    %22 = vector.load %arg5[%c0_14, %c0_15] : memref<32x128xbf16, #tpu.memory_space<vmem>>, vector<32x128xbf16>
    %cst_16 = arith.constant dense<0.000000e+00> : vector<16x128xf32>
    %23 = tpu.matmul %21, %22, %cst_16 {dimension_numbers = #tpu.dot_dimension_numbers<[1], [0], [0], [1], [0, 0, 1, 1], [], []>} : vector<16x32xbf16>, vector<32x128xbf16>, vector<16x128xf32> -> vector<16x128xf32>
    %24 = vector.broadcast %3 : vector<1x128xf32> to vector<16x128xf32>
    %25 = arith.addf %23, %24 : vector<16x128xf32>
    %cst_17 = arith.constant 0.000000e+00 : f32
    %26 = vector.broadcast %cst_17 : f32 to vector<16x128xf32>
    %27 = arith.maximumf %25, %26 : vector<16x128xf32>
    %28 = arith.truncf %19 : vector<32x128xf32> to vector<32x128xbf16>
    %c0_18 = arith.constant 0 : index
    %c0_19 = arith.constant 0 : index
    %29 = vector.load %arg6[%c0_18, %c0_19] : memref<128x512xbf16, #tpu.memory_space<vmem>>, vector<128x512xbf16>
    %cst_20 = arith.constant dense<0.000000e+00> : vector<32x512xf32>
    %30 = tpu.matmul %28, %29, %cst_20 {dimension_numbers = #tpu.dot_dimension_numbers<[1], [0], [0], [1], [0, 0, 1, 1], [], []>} : vector<32x128xbf16>, vector<128x512xbf16>, vector<32x512xf32> -> vector<32x512xf32>
    %31 = arith.truncf %27 : vector<16x128xf32> to vector<16x128xbf16>
    %c0_21 = arith.constant 0 : index
    %c0_22 = arith.constant 0 : index
    %32 = vector.load %arg7[%c0_21, %c0_22] : memref<128x512xbf16, #tpu.memory_space<vmem>>, vector<128x512xbf16>
    %cst_23 = arith.constant dense<0.000000e+00> : vector<16x512xf32>
    %33 = tpu.matmul %31, %32, %cst_23 {dimension_numbers = #tpu.dot_dimension_numbers<[1], [0], [0], [1], [0, 0, 1, 1], [], []>} : vector<16x128xbf16>, vector<128x512xbf16>, vector<16x512xf32> -> vector<16x512xf32>
    %34 = vector.shape_cast %30 : vector<32x512xf32> to vector<32x1x512xf32>
    %35 = vector.shape_cast %34 : vector<32x1x512xf32> to vector<32x1x512xf32>
    %36 = vector.broadcast %35 : vector<32x1x512xf32> to vector<32x8x512xf32>
    %37 = vector.shape_cast %36 : vector<32x8x512xf32> to vector<256x512xf32>
    %38 = vector.shape_cast %33 : vector<16x512xf32> to vector<2x1x8x512xf32>
    %39 = vector.shape_cast %38 : vector<2x1x8x512xf32> to vector<2x1x8x512xf32>
    %40 = vector.broadcast %39 : vector<2x1x8x512xf32> to vector<2x16x8x512xf32>
    %41 = vector.shape_cast %40 : vector<2x16x8x512xf32> to vector<256x512xf32>
    %42 = arith.addf %37, %41 : vector<256x512xf32>
    %43 = vector.broadcast %4 : vector<1x512xf32> to vector<256x512xf32>
    %44 = arith.addf %42, %43 : vector<256x512xf32>
    %cst_24 = arith.constant 0.000000e+00 : f32
    %45 = vector.broadcast %cst_24 : f32 to vector<256x512xf32>
    %46 = arith.maximumf %44, %45 : vector<256x512xf32>
    %47 = arith.truncf %46 : vector<256x512xf32> to vector<256x512xbf16>
    %c0_25 = arith.constant 0 : index
    %c0_26 = arith.constant 0 : index
    %48 = vector.load %arg8[%c0_25, %c0_26] : memref<512x48xbf16, #tpu.memory_space<vmem>>, vector<512x48xbf16>
    %cst_27 = arith.constant dense<0.000000e+00> : vector<256x48xf32>
    %49 = tpu.matmul %47, %48, %cst_27 {dimension_numbers = #tpu.dot_dimension_numbers<[1], [0], [0], [1], [0, 0, 1, 1], [], []>} : vector<256x512xbf16>, vector<512x48xbf16>, vector<256x48xf32> -> vector<256x48xf32>
    %50 = vector.broadcast %5 : vector<1x48xf32> to vector<256x48xf32>
    %51 = arith.addf %49, %50 : vector<256x48xf32>
    %52 = math.tanh %51 : vector<256x48xf32>
    %c0_28 = arith.constant 0 : index
    %c0_29 = arith.constant 0 : index
    %53 = vector.load %arg11[%c0_28, %c0_29] : memref<256x48xf32, #tpu.memory_space<vmem>>, vector<256x48xf32>
    tpu.vector_store %arg11[%c0_28, %c0_29], %52 {strides = array<i32>} : memref<256x48xf32, #tpu.memory_space<vmem>>, vector<256x48xf32>,
    return
  }
  func.func @transform_0(%arg0: i32) -> (i32, i32) {
    %c0_i32 = arith.constant 0 : i32
    %c0_i32_0 = arith.constant 0 : i32
    %c0_i32_1 = arith.constant 0 : i32
    return %c0_i32, %c0_i32_0 : i32, i32
  }
  func.func @transform_1(%arg0: i32) -> (i32, i32) {
    %c0_i32 = arith.constant 0 : i32
    %c0_i32_0 = arith.constant 0 : i32
    %c0_i32_1 = arith.constant 0 : i32
    return %c0_i32, %c0_i32_0 : i32, i32
  }
  func.func @transform_2(%arg0: i32) -> (i32, i32) {
    %c0_i32 = arith.constant 0 : i32
    %c0_i32_0 = arith.constant 0 : i32
    %c0_i32_1 = arith.constant 0 : i32
    return %c0_i32, %c0_i32_0 : i32, i32
  }
  func.func @transform_3(%arg0: i32) -> (i32, i32) {
    %c0_i32 = arith.constant 0 : i32
    %c0_i32_0 = arith.constant 0 : i32
    %c0_i32_1 = arith.constant 0 : i32
    return %c0_i32, %c0_i32_0 : i32, i32
  }
  func.func @transform_4(%arg0: i32) -> (i32, i32) {
    %c0_i32 = arith.constant 0 : i32
    %c0_i32_0 = arith.constant 0 : i32
    %c0_i32_1 = arith.constant 0 : i32
    return %c0_i32, %c0_i32_0 : i32, i32
  }
  func.func @transform_5(%arg0: i32) -> (i32, i32) {
    %c0_i32 = arith.constant 0 : i32
    %c0_i32_0 = arith.constant 0 : i32
    %c0_i32_1 = arith.constant 0 : i32
    return %c0_i32, %c0_i32_0 : i32, i32
  }
  func.func @transform_6(%arg0: i32) -> (i32, i32) {
    %c0_i32 = arith.constant 0 : i32
    %c0_i32_0 = arith.constant 0 : i32
    %c0_i32_1 = arith.constant 0 : i32
    return %c0_i32, %c0_i32_0 : i32, i32
  }
  func.func @transform_7(%arg0: i32) -> (i32, i32) {
    %c0_i32 = arith.constant 0 : i32
    %c0_i32_0 = arith.constant 0 : i32
    %c0_i32_1 = arith.constant 0 : i32
    return %c0_i32, %c0_i32_0 : i32, i32
  }
  func.func @transform_8(%arg0: i32) -> (i32, i32) {
    %c0_i32 = arith.constant 0 : i32
    %c0_i32_0 = arith.constant 0 : i32
    %c0_i32_1 = arith.constant 0 : i32
    return %c0_i32, %c0_i32_0 : i32, i32
  }
  func.func @transform_9(%arg0: i32) -> (i32, i32) {
    %c0_i32 = arith.constant 0 : i32
    %c0_i32_0 = arith.constant 0 : i32
    %c0_i32_1 = arith.constant 0 : i32
    return %c0_i32, %c0_i32_0 : i32, i32
  }
  func.func @transform_10(%arg0: i32) -> (i32, i32) {
    %c0_i32 = arith.constant 0 : i32
    %c0_i32_0 = arith.constant 0 : i32
    %c0_i32_1 = arith.constant 0 : i32
    return %c0_i32, %c0_i32_0 : i32, i32
  }
}

</mosaic_0001>

<llo_original>
// kernel: generator_forward.1
$region0: #{generator_forward.1}
  #allocation0 [shape = 'u32[]', space=smem, size = 0x4, offset = 0x4, fixed_abs, tag = 'smem constant byte address 0x4 - core index']
  #allocation1 [shape = 'u32[144,128]{1,0:T(1,128)}', space=vmem, size = 0x12000, scoped, tag = 'internal scratch']
  %s0 = inlined_call_operand.vmem [shape: bf16[32,32], index: 0, kind: input, shape index: {}]
  %s1 = inlined_call_operand.vmem [shape: bf16[16,32], index: 1, kind: input, shape index: {}]
  %s2 = inlined_call_operand.vmem [shape: bf16[32,64], index: 2, kind: input, shape index: {}]
  %s3 = inlined_call_operand.vmem [shape: bf16[64,128], index: 3, kind: input, shape index: {}]
  %s4 = inlined_call_operand.vmem [shape: bf16[32,128], index: 4, kind: input, shape index: {}]
  %s5 = inlined_call_operand.vmem [shape: bf16[128,512], index: 5, kind: input, shape index: {}]
  %s6 = inlined_call_operand.vmem [shape: bf16[128,512], index: 6, kind: input, shape index: {}]
  %s7 = inlined_call_operand.vmem [shape: bf16[512,48], index: 7, kind: input, shape index: {}]
  %s8 = inlined_call_operand.vmem [shape: f32[8,512], index: 8, kind: input, shape index: {}]
  %s9 = inlined_call_operand.vmem [shape: f32[32,128], index: 9, kind: output, shape index: {0}]
  %s10 = inlined_call_operand.vmem [shape: f32[256,48], index: 10, kind: output, shape index: {1}]
  %11 = xla_tuple %s9, %s10
  %s12 = sld [smem:[#allocation0]]
  $region54: #{generator_forward.1} parent=0
    _
  %s14 = ssub.s32 1, %s12
  %s15 = scalar_select 0, %s14, %s12
  // Predicated region
  $region2: #{generator_forward.1} parent=0 // pred_check
    _
  $region3: #{generator_forward.1} parent=0 // pred_check_branch
    %17 = sbr.rel (0) target = $region5
  $region4: #{generator_forward.1} parent=0 // pred_region
    _
  $region5: #{generator_forward.1} parent=0 // pred_fallthru
    _
  // Predicated region
  $region6: #{generator_forward.1} parent=0 // pred_check
    _
  $region7: #{generator_forward.1} parent=0 // pred_check_branch
    %19 = sbr.rel (0) target = $region9
  $region8: #{generator_forward.1} parent=0 // pred_region
    _
  $region9: #{generator_forward.1} parent=0 // pred_fallthru
    _
  // Predicated region
  $region10: #{generator_forward.1} parent=0 // pred_check
    _
  $region11: #{generator_forward.1} parent=0 // pred_check_branch
    %21 = sbr.rel (0) target = $region13
  $region12: #{generator_forward.1} parent=0 // pred_region
    _
  $region13: #{generator_forward.1} parent=0 // pred_fallthru
    _
  // Predicated region
  $region14: #{generator_forward.1} parent=0 // pred_check
    _
  $region15: #{generator_forward.1} parent=0 // pred_check_branch
    %23 = sbr.rel (0) target = $region17
  $region16: #{generator_forward.1} parent=0 // pred_region
    _
  $region17: #{generator_forward.1} parent=0 // pred_fallthru
    _
  // Predicated region
  $region18: #{generator_forward.1} parent=0 // pred_check
    _
  $region19: #{generator_forward.1} parent=0 // pred_check_branch
    %25 = sbr.rel (0) target = $region21
  $region20: #{generator_forward.1} parent=0 // pred_region
    _
  $region21: #{generator_forward.1} parent=0 // pred_fallthru
    _
  // Predicated region
  $region22: #{generator_forward.1} parent=0 // pred_check
    _
  $region23: #{generator_forward.1} parent=0 // pred_check_branch
    %27 = sbr.rel (0) target = $region25
  $region24: #{generator_forward.1} parent=0 // pred_region
    _
  $region25: #{generator_forward.1} parent=0 // pred_fallthru
    _
  // Predicated region
  $region26: #{generator_forward.1} parent=0 // pred_check
    _
  $region27: #{generator_forward.1} parent=0 // pred_check_branch
    %29 = sbr.rel (0) target = $region29
  $region28: #{generator_forward.1} parent=0 // pred_region
    _
  $region29: #{generator_forward.1} parent=0 // pred_fallthru
    _
  // Predicated region
  $region30: #{generator_forward.1} parent=0 // pred_check
    _
  $region31: #{generator_forward.1} parent=0 // pred_check_branch
    %31 = sbr.rel (0) target = $region33
  $region32: #{generator_forward.1} parent=0 // pred_region
    _
  $region33: #{generator_forward.1} parent=0 // pred_fallthru
    _
  // Predicated region
  $region34: #{generator_forward.1} parent=0 // pred_check
    _
  $region35: #{generator_forward.1} parent=0 // pred_check_branch
    %33 = sbr.rel (0) target = $region37
  $region36: #{generator_forward.1} parent=0 // pred_region
    _
  $region37: #{generator_forward.1} parent=0 // pred_fallthru
    _
  %v35 = vld [vmem:[%s8] sm:$0xff]
  %v36 = vld [vmem:[%s8 + $0x8] sm:$0xff]
  %v37 = vld [vmem:[%s8 + $0x10] sm:$0xff]
  %v38 = vld [vmem:[%s8 + $0x18] sm:$0xff]
  %v39 = vld [vmem:[%s0] sm:$0xf]
  %v40 = vld [vmem:[%s0 + $0x4] sm:$0xf]
  %v41 = vld [vmem:[%s0 + $0x8] sm:$0xf]
  %v42 = vld [vmem:[%s0 + $0xc] sm:$0xf]
  %v43 = vld [vmem:[%s2] sm:$0xf]
  %v44 = vld [vmem:[%s2 + $0x4] sm:$0xf]
  %v45 = vld [vmem:[%s2 + $0x8] sm:$0xf]
  %v46 = vld [vmem:[%s2 + $0xc] sm:$0xf]
  %v47 = vlaneseq
  %v48 = vshrl.u32 %v47, 7
  %v49 = vsub.s32 0, %v48
  %v50 = vrot.slane %v35, %v49
  %v55 = vunpack.c.l.b16 %v39
  %v56 = vunpack.c.l.b16 %v40
  %v57 = vunpack.c.l.b16 %v41
  %v58 = vunpack.c.l.b16 %v42
  %v59 = vpack.c.b16 %v56, %v55
  %v60 = vpack.c.b16 %v58, %v57
  %v65 = vunpack.c.l.b16 %v43
  %v66 = vunpack.c.l.b16 %v44
  %v67 = vunpack.c.l.b16 %v45
  %v68 = vunpack.c.l.b16 %v46
  %v69 = vpack.c.b16 %v66, %v65
  %v70 = vpack.c.b16 %v68, %v67
  %vm73 = vcmask 261120
  %v75 = vsel %vm73, %v59, 0
  %v78 = vsel %vm73, %v60, 0
  %80 = vmatprep.subr.bf16.mxu0 0
  %81 = vmatpush1.bf16.msra.mxu0 0
  %82 = vmatprep.subr.bf16.mxu0 0
  %83 = vmatpush1.bf16.msra.mxu0 0
  %84 = vmatprep.subr.bf16.mxu0 0
  %85 = vmatpush1.bf16.msra.mxu0 0
  %86 = vmatprep.subr.bf16.mxu0 0
  %87 = vmatpush1.bf16.msra.mxu0 0
  %88 = vmatprep.subr.bf16.mxu0 0
  %89 = vmatpush1.bf16.msra.mxu0 0
  %90 = vmatprep.subr.bf16.mxu0 0
  %91 = vmatpush1.bf16.msra.mxu0 0
  %92 = vmatprep.subr.bf16.mxu0 0
  %93 = vmatpush1.bf16.msra.mxu0 %v70
  %94 = vmatprep.subr.bf16.mxu0 0
  %95 = vmatpush1.bf16.msra.mxu0 %v69
  %96 = vmatprep.subr.bf16.mxu0 0
  %97 = vmatpush2.bf16.msra.mxu0 0
  %98 = vmatprep.subr.bf16.mxu0 0
  %99 = vmatpush2.bf16.msra.mxu0 0
  %100 = vmatprep.subr.bf16.mxu0 0
  %101 = vmatpush2.bf16.msra.mxu0 0
  %102 = vmatprep.subr.bf16.mxu0 0
  %103 = vmatpush2.bf16.msra.mxu0 0
  %104 = vmatprep.subr.bf16.mxu0 0
  %105 = vmatpush2.bf16.msra.mxu0 0
  %106 = vmatprep.subr.bf16.mxu0 0
  %107 = vmatpush2.bf16.msra.mxu0 0
  %108 = vmatprep.subr.bf16.mxu0 0
  %109 = vmatpush2.bf16.msra.mxu0 0
  %110 = vmatprep.subr.bf16.mxu0 0
  %111 = vmatpush2.bf16.msra.mxu0 0
  %112 = vmatprep.mubr.bf16.mxu0 0
  %113 = vmatmul.mubr.bf16.gmra.mxu0 %v75
  %v114 = vpop.f32.mrf.mxu0
  %v115 = vadd.f32 %v50, %v114
  %v116 = vpop.f32.mrf.mxu0
  %v117 = vpop.f32.mrf.mxu0
  %v118 = vadd.f32 %v50, %v117
  %v119 = vpop.f32.mrf.mxu0
  %120 = vmatprep.mubr.bf16.mxu0 0
  %121 = vmatmul.mubr.bf16.gmra.mxu0 %v78
  %v122 = vpop.f32.mrf.mxu0
  %v123 = vadd.f32 %v50, %v122
  %v124 = vpop.f32.mrf.mxu0
  %v125 = vpop.f32.mrf.mxu0
  %v126 = vadd.f32 %v50, %v125
  %v127 = vpop.f32.mrf.mxu0
  %128 = vdwg.mxu0
  %v129 = vmax.f32 %v115, 0.0
  %v130 = vmax.f32 %v118, 0.0
  %v131 = vmax.f32 %v123, 0.0
  %v132 = vmax.f32 %v126, 0.0
  %v133 = vpack.c.bf16 %v130, %v129
  %v134 = vpack.c.bf16 %v132, %v131
  %v135 = vld [vmem:[%s3] sm:$0xf]
  %v136 = vld [vmem:[%s3 + $0x4] sm:$0xf]
  %v137 = vld [vmem:[%s3 + $0x8] sm:$0xf]
  %v138 = vld [vmem:[%s3 + $0xc] sm:$0xf]
  %v139 = vld [vmem:[%s3 + $0x10] sm:$0xf]
  %v140 = vld [vmem:[%s3 + $0x14] sm:$0xf]
  %v141 = vld [vmem:[%s3 + $0x18] sm:$0xf]
  %v142 = vld [vmem:[%s3 + $0x1c] sm:$0xf]
  %v143 = vlaneseq
  %v144 = vshrl.u32 %v143, 7
  %v145 = vsub.s32 1, %v144
  %v146 = vrot.slane %v35, %v145
  %v155 = vunpack.c.l.b16 %v135
  %v156 = vunpack.c.l.b16 %v136
  %v157 = vunpack.c.l.b16 %v137
  %v158 = vunpack.c.l.b16 %v138
  %v159 = vunpack.c.l.b16 %v139
  %v160 = vunpack.c.l.b16 %v140
  %v161 = vunpack.c.l.b16 %v141
  %v162 = vunpack.c.l.b16 %v142
  %v163 = vpack.c.b16 %v156, %v155
  %v164 = vpack.c.b16 %v158, %v157
  %v165 = vpack.c.b16 %v160, %v159
  %v166 = vpack.c.b16 %v162, %v161
  %vm171 = vcmask 523264
  %v173 = vsel %vm171, %v133, 0
  %v176 = vsel %vm171, %v134, 0
  %178 = vmatprep.subr.bf16.mxu0 0
  %179 = vmatpush1.bf16.msra.mxu0 0
  %180 = vmatprep.subr.bf16.mxu0 0
  %181 = vmatpush1.bf16.msra.mxu0 0
  %182 = vmatprep.subr.bf16.mxu0 0
  %183 = vmatpush1.bf16.msra.mxu0 0
  %184 = vmatprep.subr.bf16.mxu0 0
  %185 = vmatpush1.bf16.msra.mxu0 0
  %186 = vmatprep.subr.bf16.mxu0 0
  %187 = vmatpush1.bf16.msra.mxu0 %v166
  %188 = vmatprep.subr.bf16.mxu0 0
  %189 = vmatpush1.bf16.msra.mxu0 %v165
  %190 = vmatprep.subr.bf16.mxu0 0
  %191 = vmatpush1.bf16.msra.mxu0 %v164
  %192 = vmatprep.subr.bf16.mxu0 0
  %193 = vmatpush1.bf16.msra.mxu0 %v163
  %194 = vmatprep.subr.bf16.mxu0 0
  %195 = vmatpush2.bf16.msra.mxu0 0
  %196 = vmatprep.subr.bf16.mxu0 0
  %197 = vmatpush2.bf16.msra.mxu0 0
  %198 = vmatprep.subr.bf16.mxu0 0
  %199 = vmatpush2.bf16.msra.mxu0 0
  %200 = vmatprep.subr.bf16.mxu0 0
  %201 = vmatpush2.bf16.msra.mxu0 0
  %202 = vmatprep.subr.bf16.mxu0 0
  %203 = vmatpush2.bf16.msra.mxu0 0
  %204 = vmatprep.subr.bf16.mxu0 0
  %205 = vmatpush2.bf16.msra.mxu0 0
  %206 = vmatprep.subr.bf16.mxu0 0
  %207 = vmatpush2.bf16.msra.mxu0 0
  %208 = vmatprep.subr.bf16.mxu0 0
  %209 = vmatpush2.bf16.msra.mxu0 0
  %210 = vmatprep.mubr.bf16.mxu0 0
  %211 = vmatmul.mubr.bf16.gmra.mxu0 %v173
  %v212 = vpop.f32.mrf.mxu0
  %v213 = vadd.f32 %v146, %v212
  %v214 = vpop.f32.mrf.mxu0
  %v215 = vpop.f32.mrf.mxu0
  %v216 = vadd.f32 %v146, %v215
  %v217 = vpop.f32.mrf.mxu0
  %218 = vmatprep.mubr.bf16.mxu0 0
  %219 = vmatmul.mubr.bf16.gmra.mxu0 %v176
  %v220 = vpop.f32.mrf.mxu0
  %v221 = vadd.f32 %v146, %v220
  %v222 = vpop.f32.mrf.mxu0
  %v223 = vpop.f32.mrf.mxu0
  %v224 = vadd.f32 %v146, %v223
  %v225 = vpop.f32.mrf.mxu0
  %226 = vdwg.mxu0
  %v227 = vmax.f32 %v213, 0.0
  %v228 = vmax.f32 %v216, 0.0
  %v229 = vmax.f32 %v221, 0.0
  %v230 = vmax.f32 %v224, 0.0
  %231 = vst [vmem:[%s9] sm:$0xff] %v227
  %232 = vst [vmem:[%s9 + $0x8] sm:$0xff] %v228
  %233 = vst [vmem:[%s9 + $0x10] sm:$0xff] %v229
  %234 = vst [vmem:[%s9 + $0x18] sm:$0xff] %v230
  %v235 = vld [vmem:[%s1] sm:$0xf]
  %v236 = vld [vmem:[%s1 + $0x4] sm:$0xf]
  %v237 = vld [vmem:[%s4] sm:$0xf]
  %v238 = vld [vmem:[%s4 + $0x4] sm:$0xf]
  %v239 = vld [vmem:[%s4 + $0x8] sm:$0xf]
  %v240 = vld [vmem:[%s4 + $0xc] sm:$0xf]
  %v241 = vlaneseq
  %v242 = vshrl.u32 %v241, 7
  %v243 = vsub.s32 2, %v242
  %v244 = vrot.slane %v35, %v243
  %v247 = vunpack.c.l.b16 %v235
  %v248 = vunpack.c.l.b16 %v236
  %v249 = vpack.c.b16 %v248, %v247
  %v254 = vunpack.c.l.b16 %v237
  %v255 = vunpack.c.l.b16 %v238
  %v256 = vunpack.c.l.b16 %v239
  %v257 = vunpack.c.l.b16 %v240
  %v258 = vpack.c.b16 %v255, %v254
  %v259 = vpack.c.b16 %v257, %v256
  %v263 = vsel %vm73, %v249, 0
  %265 = vmatprep.subr.bf16.mxu0 0
  %266 = vmatpush1.bf16.msra.mxu0 0
  %267 = vmatprep.subr.bf16.mxu0 0
  %268 = vmatpush1.bf16.msra.mxu0 0
  %269 = vmatprep.subr.bf16.mxu0 0
  %270 = vmatpush1.bf16.msra.mxu0 0
  %271 = vmatprep.subr.bf16.mxu0 0
  %272 = vmatpush1.bf16.msra.mxu0 0
  %273 = vmatprep.subr.bf16.mxu0 0
  %274 = vmatpush1.bf16.msra.mxu0 0
  %275 = vmatprep.subr.bf16.mxu0 0
  %276 = vmatpush1.bf16.msra.mxu0 0
  %277 = vmatprep.subr.bf16.mxu0 0
  %278 = vmatpush1.bf16.msra.mxu0 %v259
  %279 = vmatprep.subr.bf16.mxu0 0
  %280 = vmatpush1.bf16.msra.mxu0 %v258
  %281 = vmatprep.subr.bf16.mxu0 0
  %282 = vmatpush2.bf16.msra.mxu0 0
  %283 = vmatprep.subr.bf16.mxu0 0
  %284 = vmatpush2.bf16.msra.mxu0 0
  %285 = vmatprep.subr.bf16.mxu0 0
  %286 = vmatpush2.bf16.msra.mxu0 0
  %287 = vmatprep.subr.bf16.mxu0 0
  %288 = vmatpush2.bf16.msra.mxu0 0
  %289 = vmatprep.subr.bf16.mxu0 0
  %290 = vmatpush2.bf16.msra.mxu0 0
  %291 = vmatprep.subr.bf16.mxu0 0
  %292 = vmatpush2.bf16.msra.mxu0 0
  %293 = vmatprep.subr.bf16.mxu0 0
  %294 = vmatpush2.bf16.msra.mxu0 0
  %295 = vmatprep.subr.bf16.mxu0 0
  %296 = vmatpush2.bf16.msra.mxu0 0
  %297 = vmatprep.mubr.bf16.mxu0 0
  %298 = vmatmul.mubr.bf16.gmra.mxu0 %v263
  %v299 = vpop.f32.mrf.mxu0
  %v300 = vadd.f32 %v244, %v299
  %v301 = vpop.f32.mrf.mxu0
  %v302 = vpop.f32.mrf.mxu0
  %v303 = vadd.f32 %v244, %v302
  %v304 = vpop.f32.mrf.mxu0
  %305 = vdwg.mxu0
  %v306 = vmax.f32 %v300, 0.0
  %v307 = vmax.f32 %v303, 0.0
  %v308 = vpack.c.bf16 %v228, %v227
  %v309 = vpack.c.bf16 %v230, %v229
  %v310 = vld [vmem:[%s5] sm:$0xff]
  %v311 = vld [vmem:[%s5 + $0x8] sm:$0xff]
  %v312 = vld [vmem:[%s5 + $0x10] sm:$0xff]
  %v313 = vld [vmem:[%s5 + $0x18] sm:$0xff]
  %v314 = vld [vmem:[%s5 + $0x20] sm:$0xff]
  %v315 = vld [vmem:[%s5 + $0x28] sm:$0xff]
  %v316 = vld [vmem:[%s5 + $0x30] sm:$0xff]
  %v317 = vld [vmem:[%s5 + $0x38] sm:$0xff]
  %v318 = vld [vmem:[%s5 + $0x40] sm:$0xff]
  %v319 = vld [vmem:[%s5 + $0x48] sm:$0xff]
  %v320 = vld [vmem:[%s5 + $0x50] sm:$0xff]
  %v321 = vld [vmem:[%s5 + $0x58] sm:$0xff]
  %v322 = vld [vmem:[%s5 + $0x60] sm:$0xff]
  %v323 = vld [vmem:[%s5 + $0x68] sm:$0xff]
  %v324 = vld [vmem:[%s5 + $0x70] sm:$0xff]
  %v325 = vld [vmem:[%s5 + $0x78] sm:$0xff]
  %v326 = vld [vmem:[%s5 + $0x80] sm:$0xff]
  %v327 = vld [vmem:[%s5 + $0x88] sm:$0xff]
  %v328 = vld [vmem:[%s5 + $0x90] sm:$0xff]
  %v329 = vld [vmem:[%s5 + $0x98] sm:$0xff]
  %v330 = vld [vmem:[%s5 + $0xa0] sm:$0xff]
  %v331 = vld [vmem:[%s5 + $0xa8] sm:$0xff]
  %v332 = vld [vmem:[%s5 + $0xb0] sm:$0xff]
  %v333 = vld [vmem:[%s5 + $0xb8] sm:$0xff]
  %v334 = vld [vmem:[%s5 + $0xc0] sm:$0xff]
  %v335 = vld [vmem:[%s5 + $0xc8] sm:$0xff]
  %v336 = vld [vmem:[%s5 + $0xd0] sm:$0xff]
  %v337 = vld [vmem:[%s5 + $0xd8] sm:$0xff]
  %v338 = vld [vmem:[%s5 + $0xe0] sm:$0xff]
  %v339 = vld [vmem:[%s5 + $0xe8] sm:$0xff]
  %v340 = vld [vmem:[%s5 + $0xf0] sm:$0xff]
  %v341 = vld [vmem:[%s5 + $0xf8] sm:$0xff]
  %v374 = vunpack.c.l.b16 %v310
  %v375 = vunpack.c.h.b16 %v310
  %v376 = vunpack.c.l.b16 %v311
  %v377 = vunpack.c.h.b16 %v311
  %v378 = vunpack.c.l.b16 %v312
  %v379 = vunpack.c.h.b16 %v312
  %v380 = vunpack.c.l.b16 %v313
  %v381 = vunpack.c.h.b16 %v313
  %v382 = vunpack.c.l.b16 %v314
  %v383 = vunpack.c.h.b16 %v314
  %v384 = vunpack.c.l.b16 %v315
  %v385 = vunpack.c.h.b16 %v315
  %v386 = vunpack.c.l.b16 %v316
  %v387 = vunpack.c.h.b16 %v316
  %v388 = vunpack.c.l.b16 %v317
  %v389 = vunpack.c.h.b16 %v317
  %v390 = vunpack.c.l.b16 %v318
  %v391 = vunpack.c.h.b16 %v318
  %v392 = vunpack.c.l.b16 %v319
  %v393 = vunpack.c.h.b16 %v319
  %v394 = vunpack.c.l.b16 %v320
  %v395 = vunpack.c.h.b16 %v320
  %v396 = vunpack.c.l.b16 %v321
  %v397 = vunpack.c.h.b16 %v321
  %v398 = vunpack.c.l.b16 %v322
  %v399 = vunpack.c.h.b16 %v322
  %v400 = vunpack.c.l.b16 %v323
  %v401 = vunpack.c.h.b16 %v323
  %v402 = vunpack.c.l.b16 %v324
  %v403 = vunpack.c.h.b16 %v324
  %v404 = vunpack.c.l.b16 %v325
  %v405 = vunpack.c.h.b16 %v325
  %v406 = vunpack.c.l.b16 %v326
  %v407 = vunpack.c.h.b16 %v326
  %v408 = vunpack.c.l.b16 %v327
  %v409 = vunpack.c.h.b16 %v327
  %v410 = vunpack.c.l.b16 %v328
  %v411 = vunpack.c.h.b16 %v328
  %v412 = vunpack.c.l.b16 %v329
  %v413 = vunpack.c.h.b16 %v329
  %v414 = vunpack.c.l.b16 %v330
  %v415 = vunpack.c.h.b16 %v330
  %v416 = vunpack.c.l.b16 %v331
  %v417 = vunpack.c.h.b16 %v331
  %v418 = vunpack.c.l.b16 %v332
  %v419 = vunpack.c.h.b16 %v332
  %v420 = vunpack.c.l.b16 %v333
  %v421 = vunpack.c.h.b16 %v333
  %v422 = vunpack.c.l.b16 %v334
  %v423 = vunpack.c.h.b16 %v334
  %v424 = vunpack.c.l.b16 %v335
  %v425 = vunpack.c.h.b16 %v335
  %v426 = vunpack.c.l.b16 %v336
  %v427 = vunpack.c.h.b16 %v336
  %v428 = vunpack.c.l.b16 %v337
  %v429 = vunpack.c.h.b16 %v337
  %v430 = vunpack.c.l.b16 %v338
  %v431 = vunpack.c.h.b16 %v338
  %v432 = vunpack.c.l.b16 %v339
  %v433 = vunpack.c.h.b16 %v339
  %v434 = vunpack.c.l.b16 %v340
  %v435 = vunpack.c.h.b16 %v340
  %v436 = vunpack.c.l.b16 %v341
  %v437 = vunpack.c.h.b16 %v341
  %v438 = vpack.c.b16 %v378, %v374
  %v439 = vpack.c.b16 %v379, %v375
  %v440 = vpack.c.b16 %v380, %v376
  %v441 = vpack.c.b16 %v381, %v377
  %v442 = vpack.c.b16 %v386, %v382
  %v443 = vpack.c.b16 %v387, %v383
  %v444 = vpack.c.b16 %v388, %v384
  %v445 = vpack.c.b16 %v389, %v385
  %v446 = vpack.c.b16 %v394, %v390
  %v447 = vpack.c.b16 %v395, %v391
  %v448 = vpack.c.b16 %v396, %v392
  %v449 = vpack.c.b16 %v397, %v393
  %v450 = vpack.c.b16 %v402, %v398
  %v451 = vpack.c.b16 %v403, %v399
  %v452 = vpack.c.b16 %v404, %v400
  %v453 = vpack.c.b16 %v405, %v401
  %v454 = vpack.c.b16 %v410, %v406
  %v455 = vpack.c.b16 %v411, %v407
  %v456 = vpack.c.b16 %v412, %v408
  %v457 = vpack.c.b16 %v413, %v409
  %v458 = vpack.c.b16 %v418, %v414
  %v459 = vpack.c.b16 %v419, %v415
  %v460 = vpack.c.b16 %v420, %v416
  %v461 = vpack.c.b16 %v421, %v417
  %v462 = vpack.c.b16 %v426, %v422
  %v463 = vpack.c.b16 %v427, %v423
  %v464 = vpack.c.b16 %v428, %v424
  %v465 = vpack.c.b16 %v429, %v425
  %v466 = vpack.c.b16 %v434, %v430
  %v467 = vpack.c.b16 %v435, %v431
  %v468 = vpack.c.b16 %v436, %v432
  %v469 = vpack.c.b16 %v437, %v433
  %502 = vmatprep.subr.bf16.mxu0 %v467
  %503 = vmatpush1.bf16.msra.mxu0 %v466
  %504 = vmatprep.subr.bf16.mxu0 %v463
  %505 = vmatpush1.bf16.msra.mxu0 %v462
  %506 = vmatprep.subr.bf16.mxu0 %v459
  %507 = vmatpush1.bf16.msra.mxu0 %v458
  %508 = vmatprep.subr.bf16.mxu0 %v455
  %509 = vmatpush1.bf16.msra.mxu0 %v454
  %510 = vmatprep.subr.bf16.mxu0 %v451
  %511 = vmatpush1.bf16.msra.mxu0 %v450
  %512 = vmatprep.subr.bf16.mxu0 %v447
  %513 = vmatpush1.bf16.msra.mxu0 %v446
  %514 = vmatprep.subr.bf16.mxu0 %v443
  %515 = vmatpush1.bf16.msra.mxu0 %v442
  %516 = vmatprep.subr.bf16.mxu0 %v439
  %517 = vmatpush1.bf16.msra.mxu0 %v438
  %518 = vmatprep.subr.bf16.mxu0 0
  %519 = vmatpush2.bf16.msra.mxu0 0
  %520 = vmatprep.subr.bf16.mxu0 0
  %521 = vmatpush2.bf16.msra.mxu0 0
  %522 = vmatprep.subr.bf16.mxu0 0
  %523 = vmatpush2.bf16.msra.mxu0 0
  %524 = vmatprep.subr.bf16.mxu0 0
  %525 = vmatpush2.bf16.msra.mxu0 0
  %526 = vmatprep.subr.bf16.mxu0 0
  %527 = vmatpush2.bf16.msra.mxu0 0
  %528 = vmatprep.subr.bf16.mxu0 0
  %529 = vmatpush2.bf16.msra.mxu0 0
  %530 = vmatprep.subr.bf16.mxu0 0
  %531 = vmatpush2.bf16.msra.mxu0 0
  %532 = vmatprep.subr.bf16.mxu0 0
  %533 = vmatpush2.bf16.msra.mxu0 0
  %534 = vmatprep.mubr.bf16.mxu0 0
  %535 = vmatmul.mubr.bf16.gmra.mxu0 %v308
  %v536 = vpop.f32.mrf.mxu0
  %v537 = vadd.f32 0.0, %v536
  %v538 = vpop.f32.mrf.mxu0
  %v539 = vadd.f32 0.0, %v538
  %v540 = vpop.f32.mrf.mxu0
  %v541 = vadd.f32 0.0, %v540
  %v542 = vpop.f32.mrf.mxu0
  %v543 = vadd.f32 0.0, %v542
  %544 = vmatprep.mubr.bf16.mxu0 0
  %545 = vmatmul.mubr.bf16.gmra.mxu0 %v309
  %v546 = vpop.f32.mrf.mxu0
  %v547 = vadd.f32 0.0, %v546
  %v548 = vpop.f32.mrf.mxu0
  %v549 = vadd.f32 0.0, %v548
  %v550 = vpop.f32.mrf.mxu0
  %v551 = vadd.f32 0.0, %v550
  %v552 = vpop.f32.mrf.mxu0
  %v553 = vadd.f32 0.0, %v552
  %554 = vdwg.mxu0
  %555 = vmatprep.subr.bf16.mxu0 %v469
  %556 = vmatpush1.bf16.msra.mxu0 %v468
  %557 = vmatprep.subr.bf16.mxu0 %v465
  %558 = vmatpush1.bf16.msra.mxu0 %v464
  %559 = vmatprep.subr.bf16.mxu0 %v461
  %560 = vmatpush1.bf16.msra.mxu0 %v460
  %561 = vmatprep.subr.bf16.mxu0 %v457
  %562 = vmatpush1.bf16.msra.mxu0 %v456
  %563 = vmatprep.subr.bf16.mxu0 %v453
  %564 = vmatpush1.bf16.msra.mxu0 %v452
  %565 = vmatprep.subr.bf16.mxu0 %v449
  %566 = vmatpush1.bf16.msra.mxu0 %v448
  %567 = vmatprep.subr.bf16.mxu0 %v445
  %568 = vmatpush1.bf16.msra.mxu0 %v444
  %569 = vmatprep.subr.bf16.mxu0 %v441
  %570 = vmatpush1.bf16.msra.mxu0 %v440
  %571 = vmatprep.subr.bf16.mxu0 0
  %572 = vmatpush2.bf16.msra.mxu0 0
  %573 = vmatprep.subr.bf16.mxu0 0
  %574 = vmatpush2.bf16.msra.mxu0 0
  %575 = vmatprep.subr.bf16.mxu0 0
  %576 = vmatpush2.bf16.msra.mxu0 0
  %577 = vmatprep.subr.bf16.mxu0 0
  %578 = vmatpush2.bf16.msra.mxu0 0
  %579 = vmatprep.subr.bf16.mxu0 0
  %580 = vmatpush2.bf16.msra.mxu0 0
  %581 = vmatprep.subr.bf16.mxu0 0
  %582 = vmatpush2.bf16.msra.mxu0 0
  %583 = vmatprep.subr.bf16.mxu0 0
  %584 = vmatpush2.bf16.msra.mxu0 0
  %585 = vmatprep.subr.bf16.mxu0 0
  %586 = vmatpush2.bf16.msra.mxu0 0
  %587 = vmatprep.mubr.bf16.mxu0 0
  %588 = vmatmul.mubr.bf16.gmra.mxu0 %v308
  %v589 = vpop.f32.mrf.mxu0
  %v590 = vadd.f32 0.0, %v589
  %v591 = vpop.f32.mrf.mxu0
  %v592 = vadd.f32 0.0, %v591
  %v593 = vpop.f32.mrf.mxu0
  %v594 = vadd.f32 0.0, %v593
  %v595 = vpop.f32.mrf.mxu0
  %v596 = vadd.f32 0.0, %v595
  %597 = vmatprep.mubr.bf16.mxu0 0
  %598 = vmatmul.mubr.bf16.gmra.mxu0 %v309
  %v599 = vpop.f32.mrf.mxu0
  %v600 = vadd.f32 0.0, %v599
  %v601 = vpop.f32.mrf.mxu0
  %v602 = vadd.f32 0.0, %v601
  %v603 = vpop.f32.mrf.mxu0
  %v604 = vadd.f32 0.0, %v603
  %v605 = vpop.f32.mrf.mxu0
  %v606 = vadd.f32 0.0, %v605
  %607 = vdwg.mxu0
  %v608 = vpack.c.bf16 %v307, %v306
  %v609 = vld [vmem:[%s6] sm:$0xff]
  %v610 = vld [vmem:[%s6 + $0x8] sm:$0xff]
  %v611 = vld [vmem:[%s6 + $0x10] sm:$0xff]
  %v612 = vld [vmem:[%s6 + $0x18] sm:$0xff]
  %v613 = vld [vmem:[%s6 + $0x20] sm:$0xff]
  %v614 = vld [vmem:[%s6 + $0x28] sm:$0xff]
  %v615 = vld [vmem:[%s6 + $0x30] sm:$0xff]
  %v616 = vld [vmem:[%s6 + $0x38] sm:$0xff]
  %v617 = vld [vmem:[%s6 + $0x40] sm:$0xff]
  %v618 = vld [vmem:[%s6 + $0x48] sm:$0xff]
  %v619 = vld [vmem:[%s6 + $0x50] sm:$0xff]
  %v620 = vld [vmem:[%s6 + $0x58] sm:$0xff]
  %v621 = vld [vmem:[%s6 + $0x60] sm:$0xff]
  %v622 = vld [vmem:[%s6 + $0x68] sm:$0xff]
  %v623 = vld [vmem:[%s6 + $0x70] sm:$0xff]
  %v624 = vld [vmem:[%s6 + $0x78] sm:$0xff]
  %v625 = vld [vmem:[%s6 + $0x80] sm:$0xff]
  %v626 = vld [vmem:[%s6 + $0x88] sm:$0xff]
  %v627 = vld [vmem:[%s6 + $0x90] sm:$0xff]
  %v628 = vld [vmem:[%s6 + $0x98] sm:$0xff]
  %v629 = vld [vmem:[%s6 + $0xa0] sm:$0xff]
  %v630 = vld [vmem:[%s6 + $0xa8] sm:$0xff]
  %v631 = vld [vmem:[%s6 + $0xb0] sm:$0xff]
  %v632 = vld [vmem:[%s6 + $0xb8] sm:$0xff]
  %v633 = vld [vmem:[%s6 + $0xc0] sm:$0xff]
  %v634 = vld [vmem:[%s6 + $0xc8] sm:$0xff]
  %v635 = vld [vmem:[%s6 + $0xd0] sm:$0xff]
  %v636 = vld [vmem:[%s6 + $0xd8] sm:$0xff]
  %v637 = vld [vmem:[%s6 + $0xe0] sm:$0xff]
  %v638 = vld [vmem:[%s6 + $0xe8] sm:$0xff]
  %v639 = vld [vmem:[%s6 + $0xf0] sm:$0xff]
  %v640 = vld [vmem:[%s6 + $0xf8] sm:$0xff]
  %v673 = vunpack.c.l.b16 %v609
  %v674 = vunpack.c.h.b16 %v609
  %v675 = vunpack.c.l.b16 %v610
  %v676 = vunpack.c.h.b16 %v610
  %v677 = vunpack.c.l.b16 %v611
  %v678 = vunpack.c.h.b16 %v611
  %v679 = vunpack.c.l.b16 %v612
  %v680 = vunpack.c.h.b16 %v612
  %v681 = vunpack.c.l.b16 %v613
  %v682 = vunpack.c.h.b16 %v613
  %v683 = vunpack.c.l.b16 %v614
  %v684 = vunpack.c.h.b16 %v614
  %v685 = vunpack.c.l.b16 %v615
  %v686 = vunpack.c.h.b16 %v615
  %v687 = vunpack.c.l.b16 %v616
  %v688 = vunpack.c.h.b16 %v616
  %v689 = vunpack.c.l.b16 %v617
  %v690 = vunpack.c.h.b16 %v617
  %v691 = vunpack.c.l.b16 %v618
  %v692 = vunpack.c.h.b16 %v618
  %v693 = vunpack.c.l.b16 %v619
  %v694 = vunpack.c.h.b16 %v619
  %v695 = vunpack.c.l.b16 %v620
  %v696 = vunpack.c.h.b16 %v620
  %v697 = vunpack.c.l.b16 %v621
  %v698 = vunpack.c.h.b16 %v621
  %v699 = vunpack.c.l.b16 %v622
  %v700 = vunpack.c.h.b16 %v622
  %v701 = vunpack.c.l.b16 %v623
  %v702 = vunpack.c.h.b16 %v623
  %v703 = vunpack.c.l.b16 %v624
  %v704 = vunpack.c.h.b16 %v624
  %v705 = vunpack.c.l.b16 %v625
  %v706 = vunpack.c.h.b16 %v625
  %v707 = vunpack.c.l.b16 %v626
  %v708 = vunpack.c.h.b16 %v626
  %v709 = vunpack.c.l.b16 %v627
  %v710 = vunpack.c.h.b16 %v627
  %v711 = vunpack.c.l.b16 %v628
  %v712 = vunpack.c.h.b16 %v628
  %v713 = vunpack.c.l.b16 %v629
  %v714 = vunpack.c.h.b16 %v629
  %v715 = vunpack.c.l.b16 %v630
  %v716 = vunpack.c.h.b16 %v630
  %v717 = vunpack.c.l.b16 %v631
  %v718 = vunpack.c.h.b16 %v631
  %v719 = vunpack.c.l.b16 %v632
  %v720 = vunpack.c.h.b16 %v632
  %v721 = vunpack.c.l.b16 %v633
  %v722 = vunpack.c.h.b16 %v633
  %v723 = vunpack.c.l.b16 %v634
  %v724 = vunpack.c.h.b16 %v634
  %v725 = vunpack.c.l.b16 %v635
  %v726 = vunpack.c.h.b16 %v635
  %v727 = vunpack.c.l.b16 %v636
  %v728 = vunpack.c.h.b16 %v636
  %v729 = vunpack.c.l.b16 %v637
  %v730 = vunpack.c.h.b16 %v637
  %v731 = vunpack.c.l.b16 %v638
  %v732 = vunpack.c.h.b16 %v638
  %v733 = vunpack.c.l.b16 %v639
  %v734 = vunpack.c.h.b16 %v639
  %v735 = vunpack.c.l.b16 %v640
  %v736 = vunpack.c.h.b16 %v640
  %v737 = vpack.c.b16 %v677, %v673
  %v738 = vpack.c.b16 %v678, %v674
  %v739 = vpack.c.b16 %v679, %v675
  %v740 = vpack.c.b16 %v680, %v676
  %v741 = vpack.c.b16 %v685, %v681
  %v742 = vpack.c.b16 %v686, %v682
  %v743 = vpack.c.b16 %v687, %v683
  %v744 = vpack.c.b16 %v688, %v684
  %v745 = vpack.c.b16 %v693, %v689
  %v746 = vpack.c.b16 %v694, %v690
  %v747 = vpack.c.b16 %v695, %v691
  %v748 = vpack.c.b16 %v696, %v692
  %v749 = vpack.c.b16 %v701, %v697
  %v750 = vpack.c.b16 %v702, %v698
  %v751 = vpack.c.b16 %v703, %v699
  %v752 = vpack.c.b16 %v704, %v700
  %v753 = vpack.c.b16 %v709, %v705
  %v754 = vpack.c.b16 %v710, %v706
  %v755 = vpack.c.b16 %v711, %v707
  %v756 = vpack.c.b16 %v712, %v708
  %v757 = vpack.c.b16 %v717, %v713
  %v758 = vpack.c.b16 %v718, %v714
  %v759 = vpack.c.b16 %v719, %v715
  %v760 = vpack.c.b16 %v720, %v716
  %v761 = vpack.c.b16 %v725, %v721
  %v762 = vpack.c.b16 %v726, %v722
  %v763 = vpack.c.b16 %v727, %v723
  %v764 = vpack.c.b16 %v728, %v724
  %v765 = vpack.c.b16 %v733, %v729
  %v766 = vpack.c.b16 %v734, %v730
  %v767 = vpack.c.b16 %v735, %v731
  %v768 = vpack.c.b16 %v736, %v732
  %801 = vmatprep.subr.bf16.mxu0 %v766
  %802 = vmatpush1.bf16.msra.mxu0 %v765
  %803 = vmatprep.subr.bf16.mxu0 %v762
  %804 = vmatpush1.bf16.msra.mxu0 %v761
  %805 = vmatprep.subr.bf16.mxu0 %v758
  %806 = vmatpush1.bf16.msra.mxu0 %v757
  %807 = vmatprep.subr.bf16.mxu0 %v754
  %808 = vmatpush1.bf16.msra.mxu0 %v753
  %809 = vmatprep.subr.bf16.mxu0 %v750
  %810 = vmatpush1.bf16.msra.mxu0 %v749
  %811 = vmatprep.subr.bf16.mxu0 %v746
  %812 = vmatpush1.bf16.msra.mxu0 %v745
  %813 = vmatprep.subr.bf16.mxu0 %v742
  %814 = vmatpush1.bf16.msra.mxu0 %v741
  %815 = vmatprep.subr.bf16.mxu0 %v738
  %816 = vmatpush1.bf16.msra.mxu0 %v737
  %817 = vmatprep.subr.bf16.mxu0 0
  %818 = vmatpush2.bf16.msra.mxu0 0
  %819 = vmatprep.subr.bf16.mxu0 0
  %820 = vmatpush2.bf16.msra.mxu0 0
  %821 = vmatprep.subr.bf16.mxu0 0
  %822 = vmatpush2.bf16.msra.mxu0 0
  %823 = vmatprep.subr.bf16.mxu0 0
  %824 = vmatpush2.bf16.msra.mxu0 0
  %825 = vmatprep.subr.bf16.mxu0 0
  %826 = vmatpush2.bf16.msra.mxu0 0
  %827 = vmatprep.subr.bf16.mxu0 0
  %828 = vmatpush2.bf16.msra.mxu0 0
  %829 = vmatprep.subr.bf16.mxu0 0
  %830 = vmatpush2.bf16.msra.mxu0 0
  %831 = vmatprep.subr.bf16.mxu0 0
  %832 = vmatpush2.bf16.msra.mxu0 0
  %833 = vmatprep.mubr.bf16.mxu0 0
  %834 = vmatmul.mubr.bf16.gmra.mxu0 %v608
  %v835 = vpop.f32.mrf.mxu0
  %v836 = vadd.f32 0.0, %v835
  %v837 = vpop.f32.mrf.mxu0
  %v838 = vadd.f32 0.0, %v837
  %v839 = vpop.f32.mrf.mxu0
  %v840 = vadd.f32 0.0, %v839
  %v841 = vpop.f32.mrf.mxu0
  %v842 = vadd.f32 0.0, %v841
  %843 = vdwg.mxu0
  %844 = vmatprep.subr.bf16.mxu0 %v768
  %845 = vmatpush1.bf16.msra.mxu0 %v767
  %846 = vmatprep.subr.bf16.mxu0 %v764
  %847 = vmatpush1.bf16.msra.mxu0 %v763
  %848 = vmatprep.subr.bf16.mxu0 %v760
  %849 = vmatpush1.bf16.msra.mxu0 %v759
  %850 = vmatprep.subr.bf16.mxu0 %v756
  %851 = vmatpush1.bf16.msra.mxu0 %v755
  %852 = vmatprep.subr.bf16.mxu0 %v752
  %853 = vmatpush1.bf16.msra.mxu0 %v751
  %854 = vmatprep.subr.bf16.mxu0 %v748
  %855 = vmatpush1.bf16.msra.mxu0 %v747
  %856 = vmatprep.subr.bf16.mxu0 %v744
  %857 = vmatpush1.bf16.msra.mxu0 %v743
  %858 = vmatprep.subr.bf16.mxu0 %v740
  %859 = vmatpush1.bf16.msra.mxu0 %v739
  %860 = vmatprep.subr.bf16.mxu0 0
  %861 = vmatpush2.bf16.msra.mxu0 0
  %862 = vmatprep.subr.bf16.mxu0 0
  %863 = vmatpush2.bf16.msra.mxu0 0
  %864 = vmatprep.subr.bf16.mxu0 0
  %865 = vmatpush2.bf16.msra.mxu0 0
  %866 = vmatprep.subr.bf16.mxu0 0
  %867 = vmatpush2.bf16.msra.mxu0 0
  %868 = vmatprep.subr.bf16.mxu0 0
  %869 = vmatpush2.bf16.msra.mxu0 0
  %870 = vmatprep.subr.bf16.mxu0 0
  %871 = vmatpush2.bf16.msra.mxu0 0
  %872 = vmatprep.subr.bf16.mxu0 0
  %873 = vmatpush2.bf16.msra.mxu0 0
  %874 = vmatprep.subr.bf16.mxu0 0
  %875 = vmatpush2.bf16.msra.mxu0 0
  %876 = vmatprep.mubr.bf16.mxu0 0
  %877 = vmatmul.mubr.bf16.gmra.mxu0 %v608
  %v878 = vpop.f32.mrf.mxu0
  %v879 = vadd.f32 0.0, %v878
  %v880 = vpop.f32.mrf.mxu0
  %v881 = vadd.f32 0.0, %v880
  %v882 = vpop.f32.mrf.mxu0
  %v883 = vadd.f32 0.0, %v882
  %v884 = vpop.f32.mrf.mxu0
  %v885 = vadd.f32 0.0, %v884
  %886 = vdwg.mxu0
  %v903 = vcombine.low %v537, %v539
  %v904 = vcombine.high %v537, %v539
  %v905 = vcombine.low %v590, %v592
  %v906 = vcombine.high %v590, %v592
  %v908 = vunpack.c.l.s4 1966171168
  %v909 = vunpack.c.0.s8 %v908
  %v910 = vlaneseq
  %v911 = vshrl.u32 %v910, 7
  %v912 = vsub.s32 %v909, %v911
  %v913 = vrot.slane %v903, %v912
  %v915 = vunpack.c.l.s4 1966171168
  %v916 = vunpack.c.0.s8 %v915
  %v917 = vlaneseq
  %v918 = vshrl.u32 %v917, 7
  %v919 = vsub.s32 %v916, %v918
  %v920 = vrot.slane %v904, %v919
  %v922 = vunpack.c.l.s4 1966171168
  %v923 = vunpack.c.0.s8 %v922
  %v924 = vlaneseq
  %v925 = vshrl.u32 %v924, 7
  %v926 = vsub.s32 %v923, %v925
  %v927 = vrot.slane %v905, %v926
  %v929 = vunpack.c.l.s4 1966171168
  %v930 = vunpack.c.0.s8 %v929
  %v931 = vlaneseq
  %v932 = vshrl.u32 %v931, 7
  %v933 = vsub.s32 %v930, %v932
  %v934 = vrot.slane %v906, %v933
  %v935 = vcombine.low %v913, %v927
  %v936 = vcombine.high %v913, %v927
  %v937 = vcombine.low %v920, %v934
  %v938 = vcombine.high %v920, %v934
  %v940 = vunpack.c.l.s4 1966171168
  %v941 = vunpack.c.0.s8 %v940
  %v942 = vlaneseq
  %v943 = vshrl.u32 %v942, 7
  %v944 = vsub.s32 %v941, %v943
  %v945 = vrot.slane %v935, %v944
  %v947 = vunpack.c.l.s4 1966171168
  %v948 = vunpack.c.0.s8 %v947
  %v949 = vlaneseq
  %v950 = vshrl.u32 %v949, 7
  %v951 = vsub.s32 %v948, %v950
  %v952 = vrot.slane %v937, %v951
  %v954 = vunpack.c.l.s4 1966171168
  %v955 = vunpack.c.0.s8 %v954
  %v956 = vlaneseq
  %v957 = vshrl.u32 %v956, 7
  %v958 = vsub.s32 %v955, %v957
  %v959 = vrot.slane %v936, %v958
  %v961 = vunpack.c.l.s4 1966171168
  %v962 = vunpack.c.0.s8 %v961
  %v963 = vlaneseq
  %v964 = vshrl.u32 %v963, 7
  %v965 = vsub.s32 %v962, %v964
  %v966 = vrot.slane %v938, %v965
  %v967 = vcombine.high %v945, %v945
  %v968 = vcombine.high %v952, %v952
  %v969 = vcombine.high %v959, %v959
  %v970 = vcombine.high %v966, %v966
  %v971 = vcombine.low %v541, %v543
  %v972 = vcombine.high %v541, %v543
  %v973 = vcombine.low %v594, %v596
  %v974 = vcombine.high %v594, %v596
  %v976 = vunpack.c.l.s4 1966171168
  %v977 = vunpack.c.0.s8 %v976
  %v978 = vlaneseq
  %v979 = vshrl.u32 %v978, 7
  %v980 = vsub.s32 %v977, %v979
  %v981 = vrot.slane %v971, %v980
  %v983 = vunpack.c.l.s4 1966171168
  %v984 = vunpack.c.0.s8 %v983
  %v985 = vlaneseq
  %v986 = vshrl.u32 %v985, 7
  %v987 = vsub.s32 %v984, %v986
  %v988 = vrot.slane %v972, %v987
  %v990 = vunpack.c.l.s4 1966171168
  %v991 = vunpack.c.0.s8 %v990
  %v992 = vlaneseq
  %v993 = vshrl.u32 %v992, 7
  %v994 = vsub.s32 %v991, %v993
  %v995 = vrot.slane %v973, %v994
  %v997 = vunpack.c.l.s4 1966171168
  %v998 = vunpack.c.0.s8 %v997
  %v999 = vlaneseq
  %v1000 = vshrl.u32 %v999, 7
  %v1001 = vsub.s32 %v998, %v1000
  %v1002 = vrot.slane %v974, %v1001
  %v1003 = vcombine.low %v981, %v995
  %v1004 = vcombine.high %v981, %v995
  %v1005 = vcombine.low %v988, %v1002
  %v1006 = vcombine.high %v988, %v1002
  %v1008 = vunpack.c.l.s4 1966171168
  %v1009 = vunpack.c.0.s8 %v1008
  %v1010 = vlaneseq
  %v1011 = vshrl.u32 %v1010, 7
  %v1012 = vsub.s32 %v1009, %v1011
  %v1013 = vrot.slane %v1003, %v1012
  %v1015 = vunpack.c.l.s4 1966171168
  %v1016 = vunpack.c.0.s8 %v1015
  %v1017 = vlaneseq
  %v1018 = vshrl.u32 %v1017, 7
  %v1019 = vsub.s32 %v1016, %v1018
  %v1020 = vrot.slane %v1005, %v1019
  %v1022 = vunpack.c.l.s4 1966171168
  %v1023 = vunpack.c.0.s8 %v1022
  %v1024 = vlaneseq
  %v1025 = vshrl.u32 %v1024, 7
  %v1026 = vsub.s32 %v1023, %v1025
  %v1027 = vrot.slane %v1004, %v1026
  %v1029 = vunpack.c.l.s4 1966171168
  %v1030 = vunpack.c.0.s8 %v1029
  %v1031 = vlaneseq
  %v1032 = vshrl.u32 %v1031, 7
  %v1033 = vsub.s32 %v1030, %v1032
  %v1034 = vrot.slane %v1006, %v1033
  %v1035 = vcombine.high %v1013, %v1013
  %v1036 = vcombine.high %v1020, %v1020
  %v1037 = vcombine.high %v1027, %v1027
  %v1038 = vcombine.high %v1034, %v1034
  %v1039 = vcombine.low %v547, %v549
  %v1040 = vcombine.high %v547, %v549
  %v1041 = vcombine.low %v600, %v602
  %v1042 = vcombine.high %v600, %v602
  %v1044 = vunpack.c.l.s4 1966171168
  %v1045 = vunpack.c.0.s8 %v1044
  %v1046 = vlaneseq
  %v1047 = vshrl.u32 %v1046, 7
  %v1048 = vsub.s32 %v1045, %v1047
  %v1049 = vrot.slane %v1039, %v1048
  %v1051 = vunpack.c.l.s4 1966171168
  %v1052 = vunpack.c.0.s8 %v1051
  %v1053 = vlaneseq
  %v1054 = vshrl.u32 %v1053, 7
  %v1055 = vsub.s32 %v1052, %v1054
  %v1056 = vrot.slane %v1040, %v1055
  %v1058 = vunpack.c.l.s4 1966171168
  %v1059 = vunpack.c.0.s8 %v1058
  %v1060 = vlaneseq
  %v1061 = vshrl.u32 %v1060, 7
  %v1062 = vsub.s32 %v1059, %v1061
  %v1063 = vrot.slane %v1041, %v1062
  %v1065 = vunpack.c.l.s4 1966171168
  %v1066 = vunpack.c.0.s8 %v1065
  %v1067 = vlaneseq
  %v1068 = vshrl.u32 %v1067, 7
  %v1069 = vsub.s32 %v1066, %v1068
  %v1070 = vrot.slane %v1042, %v1069
  %v1071 = vcombine.low %v1049, %v1063
  %v1072 = vcombine.high %v1049, %v1063
  %v1073 = vcombine.low %v1056, %v1070
  %v1074 = vcombine.high %v1056, %v1070
  %v1076 = vunpack.c.l.s4 1966171168
  %v1077 = vunpack.c.0.s8 %v1076
  %v1078 = vlaneseq
  %v1079 = vshrl.u32 %v1078, 7
  %v1080 = vsub.s32 %v1077, %v1079
  %v1081 = vrot.slane %v1071, %v1080
  %v1083 = vunpack.c.l.s4 1966171168
  %v1084 = vunpack.c.0.s8 %v1083
  %v1085 = vlaneseq
  %v1086 = vshrl.u32 %v1085, 7
  %v1087 = vsub.s32 %v1084, %v1086
  %v1088 = vrot.slane %v1073, %v1087
  %v1090 = vunpack.c.l.s4 1966171168
  %v1091 = vunpack.c.0.s8 %v1090
  %v1092 = vlaneseq
  %v1093 = vshrl.u32 %v1092, 7
  %v1094 = vsub.s32 %v1091, %v1093
  %v1095 = vrot.slane %v1072, %v1094
  %v1097 = vunpack.c.l.s4 1966171168
  %v1098 = vunpack.c.0.s8 %v1097
  %v1099 = vlaneseq
  %v1100 = vshrl.u32 %v1099, 7
  %v1101 = vsub.s32 %v1098, %v1100
  %v1102 = vrot.slane %v1074, %v1101
  %v1103 = vcombine.high %v1081, %v1081
  %v1104 = vcombine.high %v1088, %v1088
  %v1105 = vcombine.high %v1095, %v1095
  %v1106 = vcombine.high %v1102, %v1102
  %v1107 = vcombine.low %v551, %v553
  %v1108 = vcombine.high %v551, %v553
  %v1109 = vcombine.low %v604, %v606
  %v1110 = vcombine.high %v604, %v606
  %v1112 = vunpack.c.l.s4 1966171168
  %v1113 = vunpack.c.0.s8 %v1112
  %v1114 = vlaneseq
  %v1115 = vshrl.u32 %v1114, 7
  %v1116 = vsub.s32 %v1113, %v1115
  %v1117 = vrot.slane %v1107, %v1116
  %v1119 = vunpack.c.l.s4 1966171168
  %v1120 = vunpack.c.0.s8 %v1119
  %v1121 = vlaneseq
  %v1122 = vshrl.u32 %v1121, 7
  %v1123 = vsub.s32 %v1120, %v1122
  %v1124 = vrot.slane %v1108, %v1123
  %v1126 = vunpack.c.l.s4 1966171168
  %v1127 = vunpack.c.0.s8 %v1126
  %v1128 = vlaneseq
  %v1129 = vshrl.u32 %v1128, 7
  %v1130 = vsub.s32 %v1127, %v1129
  %v1131 = vrot.slane %v1109, %v1130
  %v1133 = vunpack.c.l.s4 1966171168
  %v1134 = vunpack.c.0.s8 %v1133
  %v1135 = vlaneseq
  %v1136 = vshrl.u32 %v1135, 7
  %v1137 = vsub.s32 %v1134, %v1136
  %v1138 = vrot.slane %v1110, %v1137
  %v1139 = vcombine.low %v1117, %v1131
  %v1140 = vcombine.high %v1117, %v1131
  %v1141 = vcombine.low %v1124, %v1138
  %v1142 = vcombine.high %v1124, %v1138
  %v1144 = vunpack.c.l.s4 1966171168
  %v1145 = vunpack.c.0.s8 %v1144
  %v1146 = vlaneseq
  %v1147 = vshrl.u32 %v1146, 7
  %v1148 = vsub.s32 %v1145, %v1147
  %v1149 = vrot.slane %v1139, %v1148
  %v1151 = vunpack.c.l.s4 1966171168
  %v1152 = vunpack.c.0.s8 %v1151
  %v1153 = vlaneseq
  %v1154 = vshrl.u32 %v1153, 7
  %v1155 = vsub.s32 %v1152, %v1154
  %v1156 = vrot.slane %v1141, %v1155
  %v1158 = vunpack.c.l.s4 1966171168
  %v1159 = vunpack.c.0.s8 %v1158
  %v1160 = vlaneseq
  %v1161 = vshrl.u32 %v1160, 7
  %v1162 = vsub.s32 %v1159, %v1161
  %v1163 = vrot.slane %v1140, %v1162
  %v1165 = vunpack.c.l.s4 1966171168
  %v1166 = vunpack.c.0.s8 %v1165
  %v1167 = vlaneseq
  %v1168 = vshrl.u32 %v1167, 7
  %v1169 = vsub.s32 %v1166, %v1168
  %v1170 = vrot.slane %v1142, %v1169
  %v1171 = vcombine.high %v1149, %v1149
  %v1172 = vcombine.high %v1156, %v1156
  %v1173 = vcombine.high %v1163, %v1163
  %v1174 = vcombine.high %v1170, %v1170
  %v1175 = vlaneseq
  %v1176 = vshrl.u32 %v1175, 7
  %v1177 = vsub.s32 0, %v1176
  %v1178 = vrot.slane %v945, %v1177
  %v1179 = vlaneseq
  %v1180 = vshrl.u32 %v1179, 7
  %v1181 = vsub.s32 1, %v1180
  %v1182 = vrot.slane %v945, %v1181
  %v1183 = vlaneseq
  %v1184 = vshrl.u32 %v1183, 7
  %v1185 = vsub.s32 2, %v1184
  %v1186 = vrot.slane %v945, %v1185
  %v1187 = vlaneseq
  %v1188 = vshrl.u32 %v1187, 7
  %v1189 = vsub.s32 3, %v1188
  %v1190 = vrot.slane %v945, %v1189
  %v1191 = vlaneseq
  %v1192 = vshrl.u32 %v1191, 7
  %v1193 = vsub.s32 0, %v1192
  %v1194 = vrot.slane %v959, %v1193
  %v1195 = vlaneseq
  %v1196 = vshrl.u32 %v1195, 7
  %v1197 = vsub.s32 1, %v1196
  %v1198 = vrot.slane %v959, %v1197
  %v1199 = vlaneseq
  %v1200 = vshrl.u32 %v1199, 7
  %v1201 = vsub.s32 2, %v1200
  %v1202 = vrot.slane %v959, %v1201
  %v1203 = vlaneseq
  %v1204 = vshrl.u32 %v1203, 7
  %v1205 = vsub.s32 3, %v1204
  %v1206 = vrot.slane %v959, %v1205
  %v1207 = vlaneseq
  %v1208 = vshrl.u32 %v1207, 7
  %v1209 = vsub.s32 0, %v1208
  %v1210 = vrot.slane %v967, %v1209
  %v1211 = vlaneseq
  %v1212 = vshrl.u32 %v1211, 7
  %v1213 = vsub.s32 1, %v1212
  %v1214 = vrot.slane %v967, %v1213
  %v1215 = vlaneseq
  %v1216 = vshrl.u32 %v1215, 7
  %v1217 = vsub.s32 2, %v1216
  %v1218 = vrot.slane %v967, %v1217
  %v1219 = vlaneseq
  %v1220 = vshrl.u32 %v1219, 7
  %v1221 = vsub.s32 3, %v1220
  %v1222 = vrot.slane %v967, %v1221
  %v1223 = vlaneseq
  %v1224 = vshrl.u32 %v1223, 7
  %v1225 = vsub.s32 0, %v1224
  %v1226 = vrot.slane %v969, %v1225
  %v1227 = vlaneseq
  %v1228 = vshrl.u32 %v1227, 7
  %v1229 = vsub.s32 1, %v1228
  %v1230 = vrot.slane %v969, %v1229
  %v1231 = vlaneseq
  %v1232 = vshrl.u32 %v1231, 7
  %v1233 = vsub.s32 2, %v1232
  %v1234 = vrot.slane %v969, %v1233
  %v1235 = vlaneseq
  %v1236 = vshrl.u32 %v1235, 7
  %v1237 = vsub.s32 3, %v1236
  %v1238 = vrot.slane %v969, %v1237
  %v1239 = vlaneseq
  %v1240 = vshrl.u32 %v1239, 7
  %v1241 = vsub.s32 0, %v1240
  %v1242 = vrot.slane %v952, %v1241
  %v1243 = vlaneseq
  %v1244 = vshrl.u32 %v1243, 7
  %v1245 = vsub.s32 1, %v1244
  %v1246 = vrot.slane %v952, %v1245
  %v1247 = vlaneseq
  %v1248 = vshrl.u32 %v1247, 7
  %v1249 = vsub.s32 2, %v1248
  %v1250 = vrot.slane %v952, %v1249
  %v1251 = vlaneseq
  %v1252 = vshrl.u32 %v1251, 7
  %v1253 = vsub.s32 3, %v1252
  %v1254 = vrot.slane %v952, %v1253
  %v1255 = vlaneseq
  %v1256 = vshrl.u32 %v1255, 7
  %v1257 = vsub.s32 0, %v1256
  %v1258 = vrot.slane %v966, %v1257
  %v1259 = vlaneseq
  %v1260 = vshrl.u32 %v1259, 7
  %v1261 = vsub.s32 1, %v1260
  %v1262 = vrot.slane %v966, %v1261
  %v1263 = vlaneseq
  %v1264 = vshrl.u32 %v1263, 7
  %v1265 = vsub.s32 2, %v1264
  %v1266 = vrot.slane %v966, %v1265
  %v1267 = vlaneseq
  %v1268 = vshrl.u32 %v1267, 7
  %v1269 = vsub.s32 3, %v1268
  %v1270 = vrot.slane %v966, %v1269
  %v1271 = vlaneseq
  %v1272 = vshrl.u32 %v1271, 7
  %v1273 = vsub.s32 0, %v1272
  %v1274 = vrot.slane %v968, %v1273
  %v1275 = vlaneseq
  %v1276 = vshrl.u32 %v1275, 7
  %v1277 = vsub.s32 1, %v1276
  %v1278 = vrot.slane %v968, %v1277
  %v1279 = vlaneseq
  %v1280 = vshrl.u32 %v1279, 7
  %v1281 = vsub.s32 2, %v1280
  %v1282 = vrot.slane %v968, %v1281
  %v1283 = vlaneseq
  %v1284 = vshrl.u32 %v1283, 7
  %v1285 = vsub.s32 3, %v1284
  %v1286 = vrot.slane %v968, %v1285
  %v1287 = vlaneseq
  %v1288 = vshrl.u32 %v1287, 7
  %v1289 = vsub.s32 0, %v1288
  %v1290 = vrot.slane %v970, %v1289
  %v1291 = vlaneseq
  %v1292 = vshrl.u32 %v1291, 7
  %v1293 = vsub.s32 1, %v1292
  %v1294 = vrot.slane %v970, %v1293
  %v1295 = vlaneseq
  %v1296 = vshrl.u32 %v1295, 7
  %v1297 = vsub.s32 2, %v1296
  %v1298 = vrot.slane %v970, %v1297
  %v1299 = vlaneseq
  %v1300 = vshrl.u32 %v1299, 7
  %v1301 = vsub.s32 3, %v1300
  %v1302 = vrot.slane %v970, %v1301
  %v1303 = vlaneseq
  %v1304 = vshrl.u32 %v1303, 7
  %v1305 = vsub.s32 0, %v1304
  %v1306 = vrot.slane %v1013, %v1305
  %v1307 = vlaneseq
  %v1308 = vshrl.u32 %v1307, 7
  %v1309 = vsub.s32 1, %v1308
  %v1310 = vrot.slane %v1013, %v1309
  %v1311 = vlaneseq
  %v1312 = vshrl.u32 %v1311, 7
  %v1313 = vsub.s32 2, %v1312
  %v1314 = vrot.slane %v1013, %v1313
  %v1315 = vlaneseq
  %v1316 = vshrl.u32 %v1315, 7
  %v1317 = vsub.s32 3, %v1316
  %v1318 = vrot.slane %v1013, %v1317
  %v1319 = vlaneseq
  %v1320 = vshrl.u32 %v1319, 7
  %v1321 = vsub.s32 0, %v1320
  %v1322 = vrot.slane %v1027, %v1321
  %v1323 = vlaneseq
  %v1324 = vshrl.u32 %v1323, 7
  %v1325 = vsub.s32 1, %v1324
  %v1326 = vrot.slane %v1027, %v1325
  %v1327 = vlaneseq
  %v1328 = vshrl.u32 %v1327, 7
  %v1329 = vsub.s32 2, %v1328
  %v1330 = vrot.slane %v1027, %v1329
  %v1331 = vlaneseq
  %v1332 = vshrl.u32 %v1331, 7
  %v1333 = vsub.s32 3, %v1332
  %v1334 = vrot.slane %v1027, %v1333
  %v1335 = vlaneseq
  %v1336 = vshrl.u32 %v1335, 7
  %v1337 = vsub.s32 0, %v1336
  %v1338 = vrot.slane %v1035, %v1337
  %v1339 = vlaneseq
  %v1340 = vshrl.u32 %v1339, 7
  %v1341 = vsub.s32 1, %v1340
  %v1342 = vrot.slane %v1035, %v1341
  %v1343 = vlaneseq
  %v1344 = vshrl.u32 %v1343, 7
  %v1345 = vsub.s32 2, %v1344
  %v1346 = vrot.slane %v1035, %v1345
  %v1347 = vlaneseq
  %v1348 = vshrl.u32 %v1347, 7
  %v1349 = vsub.s32 3, %v1348
  %v1350 = vrot.slane %v1035, %v1349
  %v1351 = vlaneseq
  %v1352 = vshrl.u32 %v1351, 7
  %v1353 = vsub.s32 0, %v1352
  %v1354 = vrot.slane %v1037, %v1353
  %v1355 = vlaneseq
  %v1356 = vshrl.u32 %v1355, 7
  %v1357 = vsub.s32 1, %v1356
  %v1358 = vrot.slane %v1037, %v1357
  %v1359 = vlaneseq
  %v1360 = vshrl.u32 %v1359, 7
  %v1361 = vsub.s32 2, %v1360
  %v1362 = vrot.slane %v1037, %v1361
  %v1363 = vlaneseq
  %v1364 = vshrl.u32 %v1363, 7
  %v1365 = vsub.s32 3, %v1364
  %v1366 = vrot.slane %v1037, %v1365
  %v1367 = vlaneseq
  %v1368 = vshrl.u32 %v1367, 7
  %v1369 = vsub.s32 0, %v1368
  %v1370 = vrot.slane %v1020, %v1369
  %v1371 = vlaneseq
  %v1372 = vshrl.u32 %v1371, 7
  %v1373 = vsub.s32 1, %v1372
  %v1374 = vrot.slane %v1020, %v1373
  %v1375 = vlaneseq
  %v1376 = vshrl.u32 %v1375, 7
  %v1377 = vsub.s32 2, %v1376
  %v1378 = vrot.slane %v1020, %v1377
  %v1379 = vlaneseq
  %v1380 = vshrl.u32 %v1379, 7
  %v1381 = vsub.s32 3, %v1380
  %v1382 = vrot.slane %v1020, %v1381
  %v1383 = vlaneseq
  %v1384 = vshrl.u32 %v1383, 7
  %v1385 = vsub.s32 0, %v1384
  %v1386 = vrot.slane %v1034, %v1385
  %v1387 = vlaneseq
  %v1388 = vshrl.u32 %v1387, 7
  %v1389 = vsub.s32 1, %v1388
  %v1390 = vrot.slane %v1034, %v1389
  %v1391 = vlaneseq
  %v1392 = vshrl.u32 %v1391, 7
  %v1393 = vsub.s32 2, %v1392
  %v1394 = vrot.slane %v1034, %v1393
  %v1395 = vlaneseq
  %v1396 = vshrl.u32 %v1395, 7
  %v1397 = vsub.s32 3, %v1396
  %v1398 = vrot.slane %v1034, %v1397
  %v1399 = vlaneseq
  %v1400 = vshrl.u32 %v1399, 7
  %v1401 = vsub.s32 0, %v1400
  %v1402 = vrot.slane %v1036, %v1401
  %v1403 = vlaneseq
  %v1404 = vshrl.u32 %v1403, 7
  %v1405 = vsub.s32 1, %v1404
  %v1406 = vrot.slane %v1036, %v1405
  %v1407 = vlaneseq
  %v1408 = vshrl.u32 %v1407, 7
  %v1409 = vsub.s32 2, %v1408
  %v1410 = vrot.slane %v1036, %v1409
  %v1411 = vlaneseq
  %v1412 = vshrl.u32 %v1411, 7
  %v1413 = vsub.s32 3, %v1412
  %v1414 = vrot.slane %v1036, %v1413
  %v1415 = vlaneseq
  %v1416 = vshrl.u32 %v1415, 7
  %v1417 = vsub.s32 0, %v1416
  %v1418 = vrot.slane %v1038, %v1417
  %v1419 = vlaneseq
  %v1420 = vshrl.u32 %v1419, 7
  %v1421 = vsub.s32 1, %v1420
  %v1422 = vrot.slane %v1038, %v1421
  %v1423 = vlaneseq
  %v1424 = vshrl.u32 %v1423, 7
  %v1425 = vsub.s32 2, %v1424
  %v1426 = vrot.slane %v1038, %v1425
  %v1427 = vlaneseq
  %v1428 = vshrl.u32 %v1427, 7
  %v1429 = vsub.s32 3, %v1428
  %v1430 = vrot.slane %v1038, %v1429
  %v1431 = vlaneseq
  %v1432 = vshrl.u32 %v1431, 7
  %v1433 = vsub.s32 0, %v1432
  %v1434 = vrot.slane %v1081, %v1433
  %v1435 = vlaneseq
  %v1436 = vshrl.u32 %v1435, 7
  %v1437 = vsub.s32 1, %v1436
  %v1438 = vrot.slane %v1081, %v1437
  %v1439 = vlaneseq
  %v1440 = vshrl.u32 %v1439, 7
  %v1441 = vsub.s32 2, %v1440
  %v1442 = vrot.slane %v1081, %v1441
  %v1443 = vlaneseq
  %v1444 = vshrl.u32 %v1443, 7
  %v1445 = vsub.s32 3, %v1444
  %v1446 = vrot.slane %v1081, %v1445
  %v1447 = vlaneseq
  %v1448 = vshrl.u32 %v1447, 7
  %v1449 = vsub.s32 0, %v1448
  %v1450 = vrot.slane %v1095, %v1449
  %v1451 = vlaneseq
  %v1452 = vshrl.u32 %v1451, 7
  %v1453 = vsub.s32 1, %v1452
  %v1454 = vrot.slane %v1095, %v1453
  %v1455 = vlaneseq
  %v1456 = vshrl.u32 %v1455, 7
  %v1457 = vsub.s32 2, %v1456
  %v1458 = vrot.slane %v1095, %v1457
  %v1459 = vlaneseq
  %v1460 = vshrl.u32 %v1459, 7
  %v1461 = vsub.s32 3, %v1460
  %v1462 = vrot.slane %v1095, %v1461
  %v1463 = vlaneseq
  %v1464 = vshrl.u32 %v1463, 7
  %v1465 = vsub.s32 0, %v1464
  %v1466 = vrot.slane %v1103, %v1465
  %v1467 = vlaneseq
  %v1468 = vshrl.u32 %v1467, 7
  %v1469 = vsub.s32 1, %v1468
  %v1470 = vrot.slane %v1103, %v1469
  %v1471 = vlaneseq
  %v1472 = vshrl.u32 %v1471, 7
  %v1473 = vsub.s32 2, %v1472
  %v1474 = vrot.slane %v1103, %v1473
  %v1475 = vlaneseq
  %v1476 = vshrl.u32 %v1475, 7
  %v1477 = vsub.s32 3, %v1476
  %v1478 = vrot.slane %v1103, %v1477
  %v1479 = vlaneseq
  %v1480 = vshrl.u32 %v1479, 7
  %v1481 = vsub.s32 0, %v1480
  %v1482 = vrot.slane %v1105, %v1481
  %v1483 = vlaneseq
  %v1484 = vshrl.u32 %v1483, 7
  %v1485 = vsub.s32 1, %v1484
  %v1486 = vrot.slane %v1105, %v1485
  %v1487 = vlaneseq
  %v1488 = vshrl.u32 %v1487, 7
  %v1489 = vsub.s32 2, %v1488
  %v1490 = vrot.slane %v1105, %v1489
  %v1491 = vlaneseq
  %v1492 = vshrl.u32 %v1491, 7
  %v1493 = vsub.s32 3, %v1492
  %v1494 = vrot.slane %v1105, %v1493
  %v1495 = vlaneseq
  %v1496 = vshrl.u32 %v1495, 7
  %v1497 = vsub.s32 0, %v1496
  %v1498 = vrot.slane %v1088, %v1497
  %v1499 = vlaneseq
  %v1500 = vshrl.u32 %v1499, 7
  %v1501 = vsub.s32 1, %v1500
  %v1502 = vrot.slane %v1088, %v1501
  %v1503 = vlaneseq
  %v1504 = vshrl.u32 %v1503, 7
  %v1505 = vsub.s32 2, %v1504
  %v1506 = vrot.slane %v1088, %v1505
  %v1507 = vlaneseq
  %v1508 = vshrl.u32 %v1507, 7
  %v1509 = vsub.s32 3, %v1508
  %v1510 = vrot.slane %v1088, %v1509
  %v1511 = vlaneseq
  %v1512 = vshrl.u32 %v1511, 7
  %v1513 = vsub.s32 0, %v1512
  %v1514 = vrot.slane %v1102, %v1513
  %v1515 = vlaneseq
  %v1516 = vshrl.u32 %v1515, 7
  %v1517 = vsub.s32 1, %v1516
  %v1518 = vrot.slane %v1102, %v1517
  %v1519 = vlaneseq
  %v1520 = vshrl.u32 %v1519, 7
  %v1521 = vsub.s32 2, %v1520
  %v1522 = vrot.slane %v1102, %v1521
  %v1523 = vlaneseq
  %v1524 = vshrl.u32 %v1523, 7
  %v1525 = vsub.s32 3, %v1524
  %v1526 = vrot.slane %v1102, %v1525
  %v1527 = vlaneseq
  %v1528 = vshrl.u32 %v1527, 7
  %v1529 = vsub.s32 0, %v1528
  %v1530 = vrot.slane %v1104, %v1529
  %v1531 = vlaneseq
  %v1532 = vshrl.u32 %v1531, 7
  %v1533 = vsub.s32 1, %v1532
  %v1534 = vrot.slane %v1104, %v1533
  %v1535 = vlaneseq
  %v1536 = vshrl.u32 %v1535, 7
  %v1537 = vsub.s32 2, %v1536
  %v1538 = vrot.slane %v1104, %v1537
  %v1539 = vlaneseq
  %v1540 = vshrl.u32 %v1539, 7
  %v1541 = vsub.s32 3, %v1540
  %v1542 = vrot.slane %v1104, %v1541
  %v1543 = vlaneseq
  %v1544 = vshrl.u32 %v1543, 7
  %v1545 = vsub.s32 0, %v1544
  %v1546 = vrot.slane %v1106, %v1545
  %v1547 = vlaneseq
  %v1548 = vshrl.u32 %v1547, 7
  %v1549 = vsub.s32 1, %v1548
  %v1550 = vrot.slane %v1106, %v1549
  %v1551 = vlaneseq
  %v1552 = vshrl.u32 %v1551, 7
  %v1553 = vsub.s32 2, %v1552
  %v1554 = vrot.slane %v1106, %v1553
  %v1555 = vlaneseq
  %v1556 = vshrl.u32 %v1555, 7
  %v1557 = vsub.s32 3, %v1556
  %v1558 = vrot.slane %v1106, %v1557
  %v1559 = vlaneseq
  %v1560 = vshrl.u32 %v1559, 7
  %v1561 = vsub.s32 0, %v1560
  %v1562 = vrot.slane %v1149, %v1561
  %v1563 = vlaneseq
  %v1564 = vshrl.u32 %v1563, 7
  %v1565 = vsub.s32 1, %v1564
  %v1566 = vrot.slane %v1149, %v1565
  %v1567 = vlaneseq
  %v1568 = vshrl.u32 %v1567, 7
  %v1569 = vsub.s32 2, %v1568
  %v1570 = vrot.slane %v1149, %v1569
  %v1571 = vlaneseq
  %v1572 = vshrl.u32 %v1571, 7
  %v1573 = vsub.s32 3, %v1572
  %v1574 = vrot.slane %v1149, %v1573
  %v1575 = vlaneseq
  %v1576 = vshrl.u32 %v1575, 7
  %v1577 = vsub.s32 0, %v1576
  %v1578 = vrot.slane %v1163, %v1577
  %v1579 = vlaneseq
  %v1580 = vshrl.u32 %v1579, 7
  %v1581 = vsub.s32 1, %v1580
  %v1582 = vrot.slane %v1163, %v1581
  %v1583 = vlaneseq
  %v1584 = vshrl.u32 %v1583, 7
  %v1585 = vsub.s32 2, %v1584
  %v1586 = vrot.slane %v1163, %v1585
  %v1587 = vlaneseq
  %v1588 = vshrl.u32 %v1587, 7
  %v1589 = vsub.s32 3, %v1588
  %v1590 = vrot.slane %v1163, %v1589
  %v1591 = vlaneseq
  %v1592 = vshrl.u32 %v1591, 7
  %v1593 = vsub.s32 0, %v1592
  %v1594 = vrot.slane %v1171, %v1593
  %v1595 = vlaneseq
  %v1596 = vshrl.u32 %v1595, 7
  %v1597 = vsub.s32 1, %v1596
  %v1598 = vrot.slane %v1171, %v1597
  %v1599 = vlaneseq
  %v1600 = vshrl.u32 %v1599, 7
  %v1601 = vsub.s32 2, %v1600
  %v1602 = vrot.slane %v1171, %v1601
  %v1603 = vlaneseq
  %v1604 = vshrl.u32 %v1603, 7
  %v1605 = vsub.s32 3, %v1604
  %v1606 = vrot.slane %v1171, %v1605
  %v1607 = vlaneseq
  %v1608 = vshrl.u32 %v1607, 7
  %v1609 = vsub.s32 0, %v1608
  %v1610 = vrot.slane %v1173, %v1609
  %v1611 = vlaneseq
  %v1612 = vshrl.u32 %v1611, 7
  %v1613 = vsub.s32 1, %v1612
  %v1614 = vrot.slane %v1173, %v1613
  %v1615 = vlaneseq
  %v1616 = vshrl.u32 %v1615, 7
  %v1617 = vsub.s32 2, %v1616
  %v1618 = vrot.slane %v1173, %v1617
  %v1619 = vlaneseq
  %v1620 = vshrl.u32 %v1619, 7
  %v1621 = vsub.s32 3, %v1620
  %v1622 = vrot.slane %v1173, %v1621
  %v1623 = vlaneseq
  %v1624 = vshrl.u32 %v1623, 7
  %v1625 = vsub.s32 0, %v1624
  %v1626 = vrot.slane %v1156, %v1625
  %v1627 = vlaneseq
  %v1628 = vshrl.u32 %v1627, 7
  %v1629 = vsub.s32 1, %v1628
  %v1630 = vrot.slane %v1156, %v1629
  %v1631 = vlaneseq
  %v1632 = vshrl.u32 %v1631, 7
  %v1633 = vsub.s32 2, %v1632
  %v1634 = vrot.slane %v1156, %v1633
  %v1635 = vlaneseq
  %v1636 = vshrl.u32 %v1635, 7
  %v1637 = vsub.s32 3, %v1636
  %v1638 = vrot.slane %v1156, %v1637
  %v1639 = vlaneseq
  %v1640 = vshrl.u32 %v1639, 7
  %v1641 = vsub.s32 0, %v1640
  %v1642 = vrot.slane %v1170, %v1641
  %v1643 = vlaneseq
  %v1644 = vshrl.u32 %v1643, 7
  %v1645 = vsub.s32 1, %v1644
  %v1646 = vrot.slane %v1170, %v1645
  %v1647 = vlaneseq
  %v1648 = vshrl.u32 %v1647, 7
  %v1649 = vsub.s32 2, %v1648
  %v1650 = vrot.slane %v1170, %v1649
  %v1651 = vlaneseq
  %v1652 = vshrl.u32 %v1651, 7
  %v1653 = vsub.s32 3, %v1652
  %v1654 = vrot.slane %v1170, %v1653
  %v1655 = vlaneseq
  %v1656 = vshrl.u32 %v1655, 7
  %v1657 = vsub.s32 0, %v1656
  %v1658 = vrot.slane %v1172, %v1657
  %v1659 = vlaneseq
  %v1660 = vshrl.u32 %v1659, 7
  %v1661 = vsub.s32 1, %v1660
  %v1662 = vrot.slane %v1172, %v1661
  %v1663 = vlaneseq
  %v1664 = vshrl.u32 %v1663, 7
  %v1665 = vsub.s32 2, %v1664
  %v1666 = vrot.slane %v1172, %v1665
  %v1667 = vlaneseq
  %v1668 = vshrl.u32 %v1667, 7
  %v1669 = vsub.s32 3, %v1668
  %v1670 = vrot.slane %v1172, %v1669
  %v1671 = vlaneseq
  %v1672 = vshrl.u32 %v1671, 7
  %v1673 = vsub.s32 0, %v1672
  %v1674 = vrot.slane %v1174, %v1673
  %v1675 = vlaneseq
  %v1676 = vshrl.u32 %v1675, 7
  %v1677 = vsub.s32 1, %v1676
  %v1678 = vrot.slane %v1174, %v1677
  %v1679 = vlaneseq
  %v1680 = vshrl.u32 %v1679, 7
  %v1681 = vsub.s32 2, %v1680
  %v1682 = vrot.slane %v1174, %v1681
  %v1683 = vlaneseq
  %v1684 = vshrl.u32 %v1683, 7
  %v1685 = vsub.s32 3, %v1684
  %v1686 = vrot.slane %v1174, %v1685
  %v1815 = vadd.f32 %v1178, %v836
  %v1816 = vadd.f32 %v1182, %v838
  %v1817 = vadd.f32 %v1186, %v879
  %v1818 = vadd.f32 %v1190, %v881
  %v1819 = vadd.f32 %v1194, %v836
  %v1820 = vadd.f32 %v1198, %v838
  %v1821 = vadd.f32 %v1202, %v879
  %v1822 = vadd.f32 %v1206, %v881
  %v1823 = vadd.f32 %v1210, %v836
  %v1824 = vadd.f32 %v1214, %v838
  %v1825 = vadd.f32 %v1218, %v879
  %v1826 = vadd.f32 %v1222, %v881
  %v1827 = vadd.f32 %v1226, %v836
  %v1828 = vadd.f32 %v1230, %v838
  %v1829 = vadd.f32 %v1234, %v879
  %v1830 = vadd.f32 %v1238, %v881
  %v1831 = vadd.f32 %v1242, %v836
  %v1832 = vadd.f32 %v1246, %v838
  %v1833 = vadd.f32 %v1250, %v879
  %v1834 = vadd.f32 %v1254, %v881
  %v1835 = vadd.f32 %v1258, %v836
  %v1836 = vadd.f32 %v1262, %v838
  %v1837 = vadd.f32 %v1266, %v879
  %v1838 = vadd.f32 %v1270, %v881
  %v1839 = vadd.f32 %v1274, %v836
  %v1840 = vadd.f32 %v1278, %v838
  %v1841 = vadd.f32 %v1282, %v879
  %v1842 = vadd.f32 %v1286, %v881
  %v1843 = vadd.f32 %v1290, %v836
  %v1844 = vadd.f32 %v1294, %v838
  %v1845 = vadd.f32 %v1298, %v879
  %v1846 = vadd.f32 %v1302, %v881
  %v1847 = vadd.f32 %v1306, %v836
  %v1848 = vadd.f32 %v1310, %v838
  %v1849 = vadd.f32 %v1314, %v879
  %v1850 = vadd.f32 %v1318, %v881
  %v1851 = vadd.f32 %v1322, %v836
  %v1852 = vadd.f32 %v1326, %v838
  %v1853 = vadd.f32 %v1330, %v879
  %v1854 = vadd.f32 %v1334, %v881
  %v1855 = vadd.f32 %v1338, %v836
  %v1856 = vadd.f32 %v1342, %v838
  %v1857 = vadd.f32 %v1346, %v879
  %v1858 = vadd.f32 %v1350, %v881
  %v1859 = vadd.f32 %v1354, %v836
  %v1860 = vadd.f32 %v1358, %v838
  %v1861 = vadd.f32 %v1362, %v879
  %v1862 = vadd.f32 %v1366, %v881
  %v1863 = vadd.f32 %v1370, %v836
  %v1864 = vadd.f32 %v1374, %v838
  %v1865 = vadd.f32 %v1378, %v879
  %v1866 = vadd.f32 %v1382, %v881
  %v1867 = vadd.f32 %v1386, %v836
  %v1868 = vadd.f32 %v1390, %v838
  %v1869 = vadd.f32 %v1394, %v879
  %v1870 = vadd.f32 %v1398, %v881
  %v1871 = vadd.f32 %v1402, %v836
  %v1872 = vadd.f32 %v1406, %v838
  %v1873 = vadd.f32 %v1410, %v879
  %v1874 = vadd.f32 %v1414, %v881
  %v1875 = vadd.f32 %v1418, %v836
  %v1876 = vadd.f32 %v1422, %v838
  %v1877 = vadd.f32 %v1426, %v879
  %v1878 = vadd.f32 %v1430, %v881
  %v1879 = vadd.f32 %v1434, %v840
  %v1880 = vadd.f32 %v1438, %v842
  %v1881 = vadd.f32 %v1442, %v883
  %v1882 = vadd.f32 %v1446, %v885
  %v1883 = vadd.f32 %v1450, %v840
  %v1884 = vadd.f32 %v1454, %v842
  %v1885 = vadd.f32 %v1458, %v883
  %v1886 = vadd.f32 %v1462, %v885
  %v1887 = vadd.f32 %v1466, %v840
  %v1888 = vadd.f32 %v1470, %v842
  %v1889 = vadd.f32 %v1474, %v883
  %v1890 = vadd.f32 %v1478, %v885
  %v1891 = vadd.f32 %v1482, %v840
  %v1892 = vadd.f32 %v1486, %v842
  %v1893 = vadd.f32 %v1490, %v883
  %v1894 = vadd.f32 %v1494, %v885
  %v1895 = vadd.f32 %v1498, %v840
  %v1896 = vadd.f32 %v1502, %v842
  %v1897 = vadd.f32 %v1506, %v883
  %v1898 = vadd.f32 %v1510, %v885
  %v1899 = vadd.f32 %v1514, %v840
  %v1900 = vadd.f32 %v1518, %v842
  %v1901 = vadd.f32 %v1522, %v883
  %v1902 = vadd.f32 %v1526, %v885
  %v1903 = vadd.f32 %v1530, %v840
  %v1904 = vadd.f32 %v1534, %v842
  %v1905 = vadd.f32 %v1538, %v883
  %v1906 = vadd.f32 %v1542, %v885
  %v1907 = vadd.f32 %v1546, %v840
  %v1908 = vadd.f32 %v1550, %v842
  %v1909 = vadd.f32 %v1554, %v883
  %v1910 = vadd.f32 %v1558, %v885
  %v1911 = vadd.f32 %v1562, %v840
  %v1912 = vadd.f32 %v1566, %v842
  %v1913 = vadd.f32 %v1570, %v883
  %v1914 = vadd.f32 %v1574, %v885
  %v1915 = vadd.f32 %v1578, %v840
  %v1916 = vadd.f32 %v1582, %v842
  %v1917 = vadd.f32 %v1586, %v883
  %v1918 = vadd.f32 %v1590, %v885
  %v1919 = vadd.f32 %v1594, %v840
  %v1920 = vadd.f32 %v1598, %v842
  %v1921 = vadd.f32 %v1602, %v883
  %v1922 = vadd.f32 %v1606, %v885
  %v1923 = vadd.f32 %v1610, %v840
  %v1924 = vadd.f32 %v1614, %v842
  %v1925 = vadd.f32 %v1618, %v883
  %v1926 = vadd.f32 %v1622, %v885
  %v1927 = vadd.f32 %v1626, %v840
  %v1928 = vadd.f32 %v1630, %v842
  %v1929 = vadd.f32 %v1634, %v883
  %v1930 = vadd.f32 %v1638, %v885
  %v1931 = vadd.f32 %v1642, %v840
  %v1932 = vadd.f32 %v1646, %v842
  %v1933 = vadd.f32 %v1650, %v883
  %v1934 = vadd.f32 %v1654, %v885
  %v1935 = vadd.f32 %v1658, %v840
  %v1936 = vadd.f32 %v1662, %v842
  %v1937 = vadd.f32 %v1666, %v883
  %v1938 = vadd.f32 %v1670, %v885
  %v1939 = vadd.f32 %v1674, %v840
  %v1940 = vadd.f32 %v1678, %v842
  %v1941 = vadd.f32 %v1682, %v883
  %v1942 = vadd.f32 %v1686, %v885
  %v1943 = vlaneseq
  %v1944 = vshrl.u32 %v1943, 7
  %v1945 = vsub.s32 3, %v1944
  %v1946 = vrot.slane %v35, %v1945
  %v1947 = vlaneseq
  %v1948 = vshrl.u32 %v1947, 7
  %v1949 = vsub.s32 3, %v1948
  %v1950 = vrot.slane %v36, %v1949
  %v1951 = vlaneseq
  %v1952 = vshrl.u32 %v1951, 7
  %v1953 = vsub.s32 3, %v1952
  %v1954 = vrot.slane %v37, %v1953
  %v1955 = vlaneseq
  %v1956 = vshrl.u32 %v1955, 7
  %v1957 = vsub.s32 3, %v1956
  %v1958 = vrot.slane %v38, %v1957
  %v1959 = vadd.f32 %v1815, %v1946
  %v1960 = vadd.f32 %v1816, %v1950
  %v1961 = vadd.f32 %v1817, %v1954
  %v1962 = vadd.f32 %v1818, %v1958
  %v1963 = vadd.f32 %v1819, %v1946
  %v1964 = vadd.f32 %v1820, %v1950
  %v1965 = vadd.f32 %v1821, %v1954
  %v1966 = vadd.f32 %v1822, %v1958
  %v1967 = vadd.f32 %v1823, %v1946
  %v1968 = vadd.f32 %v1824, %v1950
  %v1969 = vadd.f32 %v1825, %v1954
  %v1970 = vadd.f32 %v1826, %v1958
  %v1971 = vadd.f32 %v1827, %v1946
  %v1972 = vadd.f32 %v1828, %v1950
  %v1973 = vadd.f32 %v1829, %v1954
  %v1974 = vadd.f32 %v1830, %v1958
  %v1975 = vadd.f32 %v1831, %v1946
  %v1976 = vadd.f32 %v1832, %v1950
  %v1977 = vadd.f32 %v1833, %v1954
  %v1978 = vadd.f32 %v1834, %v1958
  %v1979 = vadd.f32 %v1835, %v1946
  %v1980 = vadd.f32 %v1836, %v1950
  %v1981 = vadd.f32 %v1837, %v1954
  %v1982 = vadd.f32 %v1838, %v1958
  %v1983 = vadd.f32 %v1839, %v1946
  %v1984 = vadd.f32 %v1840, %v1950
  %v1985 = vadd.f32 %v1841, %v1954
  %v1986 = vadd.f32 %v1842, %v1958
  %v1987 = vadd.f32 %v1843, %v1946
  %v1988 = vadd.f32 %v1844, %v1950
  %v1989 = vadd.f32 %v1845, %v1954
  %v1990 = vadd.f32 %v1846, %v1958
  %v1991 = vadd.f32 %v1847, %v1946
  %v1992 = vadd.f32 %v1848, %v1950
  %v1993 = vadd.f32 %v1849, %v1954
  %v1994 = vadd.f32 %v1850, %v1958
  %v1995 = vadd.f32 %v1851, %v1946
  %v1996 = vadd.f32 %v1852, %v1950
  %v1997 = vadd.f32 %v1853, %v1954
  %v1998 = vadd.f32 %v1854, %v1958
  %v1999 = vadd.f32 %v1855, %v1946
  %v2000 = vadd.f32 %v1856, %v1950
  %v2001 = vadd.f32 %v1857, %v1954
  %v2002 = vadd.f32 %v1858, %v1958
  %v2003 = vadd.f32 %v1859, %v1946
  %v2004 = vadd.f32 %v1860, %v1950
  %v2005 = vadd.f32 %v1861, %v1954
  %v2006 = vadd.f32 %v1862, %v1958
  %v2007 = vadd.f32 %v1863, %v1946
  %v2008 = vadd.f32 %v1864, %v1950
  %v2009 = vadd.f32 %v1865, %v1954
  %v2010 = vadd.f32 %v1866, %v1958
  %v2011 = vadd.f32 %v1867, %v1946
  %v2012 = vadd.f32 %v1868, %v1950
  %v2013 = vadd.f32 %v1869, %v1954
  %v2014 = vadd.f32 %v1870, %v1958
  %v2015 = vadd.f32 %v1871, %v1946
  %v2016 = vadd.f32 %v1872, %v1950
  %v2017 = vadd.f32 %v1873, %v1954
  %v2018 = vadd.f32 %v1874, %v1958
  %v2019 = vadd.f32 %v1875, %v1946
  %v2020 = vadd.f32 %v1876, %v1950
  %v2021 = vadd.f32 %v1877, %v1954
  %v2022 = vadd.f32 %v1878, %v1958
  %v2023 = vadd.f32 %v1879, %v1946
  %v2024 = vadd.f32 %v1880, %v1950
  %v2025 = vadd.f32 %v1881, %v1954
  %v2026 = vadd.f32 %v1882, %v1958
  %v2027 = vadd.f32 %v1883, %v1946
  %v2028 = vadd.f32 %v1884, %v1950
  %v2029 = vadd.f32 %v1885, %v1954
  %v2030 = vadd.f32 %v1886, %v1958
  %v2031 = vadd.f32 %v1887, %v1946
  %v2032 = vadd.f32 %v1888, %v1950
  %v2033 = vadd.f32 %v1889, %v1954
  %v2034 = vadd.f32 %v1890, %v1958
  %v2035 = vadd.f32 %v1891, %v1946
  %v2036 = vadd.f32 %v1892, %v1950
  %v2037 = vadd.f32 %v1893, %v1954
  %v2038 = vadd.f32 %v1894, %v1958
  %v2039 = vadd.f32 %v1895, %v1946
  %v2040 = vadd.f32 %v1896, %v1950
  %v2041 = vadd.f32 %v1897, %v1954
  %v2042 = vadd.f32 %v1898, %v1958
  %v2043 = vadd.f32 %v1899, %v1946
  %v2044 = vadd.f32 %v1900, %v1950
  %v2045 = vadd.f32 %v1901, %v1954
  %v2046 = vadd.f32 %v1902, %v1958
  %v2047 = vadd.f32 %v1903, %v1946
  %v2048 = vadd.f32 %v1904, %v1950
  %v2049 = vadd.f32 %v1905, %v1954
  %v2050 = vadd.f32 %v1906, %v1958
  %v2051 = vadd.f32 %v1907, %v1946
  %v2052 = vadd.f32 %v1908, %v1950
  %v2053 = vadd.f32 %v1909, %v1954
  %v2054 = vadd.f32 %v1910, %v1958
  %v2055 = vadd.f32 %v1911, %v1946
  %v2056 = vadd.f32 %v1912, %v1950
  %v2057 = vadd.f32 %v1913, %v1954
  %v2058 = vadd.f32 %v1914, %v1958
  %v2059 = vadd.f32 %v1915, %v1946
  %v2060 = vadd.f32 %v1916, %v1950
  %v2061 = vadd.f32 %v1917, %v1954
  %v2062 = vadd.f32 %v1918, %v1958
  %v2063 = vadd.f32 %v1919, %v1946
  %v2064 = vadd.f32 %v1920, %v1950
  %v2065 = vadd.f32 %v1921, %v1954
  %v2066 = vadd.f32 %v1922, %v1958
  %v2067 = vadd.f32 %v1923, %v1946
  %v2068 = vadd.f32 %v1924, %v1950
  %v2069 = vadd.f32 %v1925, %v1954
  %v2070 = vadd.f32 %v1926, %v1958
  %v2071 = vadd.f32 %v1927, %v1946
  %v2072 = vadd.f32 %v1928, %v1950
  %v2073 = vadd.f32 %v1929, %v1954
  %v2074 = vadd.f32 %v1930, %v1958
  %v2075 = vadd.f32 %v1931, %v1946
  %v2076 = vadd.f32 %v1932, %v1950
  %v2077 = vadd.f32 %v1933, %v1954
  %v2078 = vadd.f32 %v1934, %v1958
  %v2079 = vadd.f32 %v1935, %v1946
  %v2080 = vadd.f32 %v1936, %v1950
  %v2081 = vadd.f32 %v1937, %v1954
  %v2082 = vadd.f32 %v1938, %v1958
  %v2083 = vadd.f32 %v1939, %v1946
  %v2084 = vadd.f32 %v1940, %v1950
  %v2085 = vadd.f32 %v1941, %v1954
  %v2086 = vadd.f32 %v1942, %v1958
  %v2087 = vmax.f32 %v1959, 0.0
  %v2088 = vmax.f32 %v1960, 0.0
  %v2089 = vmax.f32 %v1961, 0.0
  %v2090 = vmax.f32 %v1962, 0.0
  %v2091 = vmax.f32 %v1963, 0.0
  %v2092 = vmax.f32 %v1964, 0.0
  %v2093 = vmax.f32 %v1965, 0.0
  %v2094 = vmax.f32 %v1966, 0.0
  %v2095 = vmax.f32 %v1967, 0.0
  %v2096 = vmax.f32 %v1968, 0.0
  %v2097 = vmax.f32 %v1969, 0.0
  %v2098 = vmax.f32 %v1970, 0.0
  %v2099 = vmax.f32 %v1971, 0.0
  %v2100 = vmax.f32 %v1972, 0.0
  %v2101 = vmax.f32 %v1973, 0.0
  %v2102 = vmax.f32 %v1974, 0.0
  %v2103 = vmax.f32 %v1975, 0.0
  %v2104 = vmax.f32 %v1976, 0.0
  %v2105 = vmax.f32 %v1977, 0.0
  %v2106 = vmax.f32 %v1978, 0.0
  %v2107 = vmax.f32 %v1979, 0.0
  %v2108 = vmax.f32 %v1980, 0.0
  %v2109 = vmax.f32 %v1981, 0.0
  %v2110 = vmax.f32 %v1982, 0.0
  %v2111 = vmax.f32 %v1983, 0.0
  %v2112 = vmax.f32 %v1984, 0.0
  %v2113 = vmax.f32 %v1985, 0.0
  %v2114 = vmax.f32 %v1986, 0.0
  %v2115 = vmax.f32 %v1987, 0.0
  %v2116 = vmax.f32 %v1988, 0.0
  %v2117 = vmax.f32 %v1989, 0.0
  %v2118 = vmax.f32 %v1990, 0.0
  %v2119 = vmax.f32 %v1991, 0.0
  %v2120 = vmax.f32 %v1992, 0.0
  %v2121 = vmax.f32 %v1993, 0.0
  %v2122 = vmax.f32 %v1994, 0.0
  %v2123 = vmax.f32 %v1995, 0.0
  %v2124 = vmax.f32 %v1996, 0.0
  %v2125 = vmax.f32 %v1997, 0.0
  %v2126 = vmax.f32 %v1998, 0.0
  %v2127 = vmax.f32 %v1999, 0.0
  %v2128 = vmax.f32 %v2000, 0.0
  %v2129 = vmax.f32 %v2001, 0.0
  %v2130 = vmax.f32 %v2002, 0.0
  %v2131 = vmax.f32 %v2003, 0.0
  %v2132 = vmax.f32 %v2004, 0.0
  %v2133 = vmax.f32 %v2005, 0.0
  %v2134 = vmax.f32 %v2006, 0.0
  %v2135 = vmax.f32 %v2007, 0.0
  %v2136 = vmax.f32 %v2008, 0.0
  %v2137 = vmax.f32 %v2009, 0.0
  %v2138 = vmax.f32 %v2010, 0.0
  %v2139 = vmax.f32 %v2011, 0.0
  %v2140 = vmax.f32 %v2012, 0.0
  %v2141 = vmax.f32 %v2013, 0.0
  %v2142 = vmax.f32 %v2014, 0.0
  %v2143 = vmax.f32 %v2015, 0.0
  %v2144 = vmax.f32 %v2016, 0.0
  %v2145 = vmax.f32 %v2017, 0.0
  %v2146 = vmax.f32 %v2018, 0.0
  %v2147 = vmax.f32 %v2019, 0.0
  %v2148 = vmax.f32 %v2020, 0.0
  %v2149 = vmax.f32 %v2021, 0.0
  %v2150 = vmax.f32 %v2022, 0.0
  %v2151 = vmax.f32 %v2023, 0.0
  %v2152 = vmax.f32 %v2024, 0.0
  %v2153 = vmax.f32 %v2025, 0.0
  %v2154 = vmax.f32 %v2026, 0.0
  %v2155 = vmax.f32 %v2027, 0.0
  %v2156 = vmax.f32 %v2028, 0.0
  %v2157 = vmax.f32 %v2029, 0.0
  %v2158 = vmax.f32 %v2030, 0.0
  %v2159 = vmax.f32 %v2031, 0.0
  %v2160 = vmax.f32 %v2032, 0.0
  %v2161 = vmax.f32 %v2033, 0.0
  %v2162 = vmax.f32 %v2034, 0.0
  %v2163 = vmax.f32 %v2035, 0.0
  %v2164 = vmax.f32 %v2036, 0.0
  %v2165 = vmax.f32 %v2037, 0.0
  %v2166 = vmax.f32 %v2038, 0.0
  %v2167 = vmax.f32 %v2039, 0.0
  %v2168 = vmax.f32 %v2040, 0.0
  %v2169 = vmax.f32 %v2041, 0.0
  %v2170 = vmax.f32 %v2042, 0.0
  %v2171 = vmax.f32 %v2043, 0.0
  %v2172 = vmax.f32 %v2044, 0.0
  %v2173 = vmax.f32 %v2045, 0.0
  %v2174 = vmax.f32 %v2046, 0.0
  %v2175 = vmax.f32 %v2047, 0.0
  %v2176 = vmax.f32 %v2048, 0.0
  %v2177 = vmax.f32 %v2049, 0.0
  %v2178 = vmax.f32 %v2050, 0.0
  %v2179 = vmax.f32 %v2051, 0.0
  %v2180 = vmax.f32 %v2052, 0.0
  %v2181 = vmax.f32 %v2053, 0.0
  %v2182 = vmax.f32 %v2054, 0.0
  %v2183 = vmax.f32 %v2055, 0.0
  %v2184 = vmax.f32 %v2056, 0.0
  %v2185 = vmax.f32 %v2057, 0.0
  %v2186 = vmax.f32 %v2058, 0.0
  %v2187 = vmax.f32 %v2059, 0.0
  %v2188 = vmax.f32 %v2060, 0.0
  %v2189 = vmax.f32 %v2061, 0.0
  %v2190 = vmax.f32 %v2062, 0.0
  %v2191 = vmax.f32 %v2063, 0.0
  %v2192 = vmax.f32 %v2064, 0.0
  %v2193 = vmax.f32 %v2065, 0.0
  %v2194 = vmax.f32 %v2066, 0.0
  %v2195 = vmax.f32 %v2067, 0.0
  %v2196 = vmax.f32 %v2068, 0.0
  %v2197 = vmax.f32 %v2069, 0.0
  %v2198 = vmax.f32 %v2070, 0.0
  %v2199 = vmax.f32 %v2071, 0.0
  %v2200 = vmax.f32 %v2072, 0.0
  %v2201 = vmax.f32 %v2073, 0.0
  %v2202 = vmax.f32 %v2074, 0.0
  %v2203 = vmax.f32 %v2075, 0.0
  %v2204 = vmax.f32 %v2076, 0.0
  %v2205 = vmax.f32 %v2077, 0.0
  %v2206 = vmax.f32 %v2078, 0.0
  %v2207 = vmax.f32 %v2079, 0.0
  %v2208 = vmax.f32 %v2080, 0.0
  %v2209 = vmax.f32 %v2081, 0.0
  %v2210 = vmax.f32 %v2082, 0.0
  %v2211 = vmax.f32 %v2083, 0.0
  %v2212 = vmax.f32 %v2084, 0.0
  %v2213 = vmax.f32 %v2085, 0.0
  %v2214 = vmax.f32 %v2086, 0.0
  %v2215 = vpack.c.bf16 %v2091, %v2087
  %v2216 = vpack.c.bf16 %v2092, %v2088
  %v2217 = vpack.c.bf16 %v2093, %v2089
  %v2218 = vpack.c.bf16 %v2094, %v2090
  %v2219 = vpack.c.bf16 %v2099, %v2095
  %v2220 = vpack.c.bf16 %v2100, %v2096
  %v2221 = vpack.c.bf16 %v2101, %v2097
  %v2222 = vpack.c.bf16 %v2102, %v2098
  %v2223 = vpack.c.bf16 %v2107, %v2103
  %v2224 = vpack.c.bf16 %v2108, %v2104
  %v2225 = vpack.c.bf16 %v2109, %v2105
  %v2226 = vpack.c.bf16 %v2110, %v2106
  %v2227 = vpack.c.bf16 %v2115, %v2111
  %v2228 = vpack.c.bf16 %v2116, %v2112
  %v2229 = vpack.c.bf16 %v2117, %v2113
  %v2230 = vpack.c.bf16 %v2118, %v2114
  %v2231 = vpack.c.bf16 %v2123, %v2119
  %v2232 = vpack.c.bf16 %v2124, %v2120
  %v2233 = vpack.c.bf16 %v2125, %v2121
  %v2234 = vpack.c.bf16 %v2126, %v2122
  %v2235 = vpack.c.bf16 %v2131, %v2127
  %v2236 = vpack.c.bf16 %v2132, %v2128
  %v2237 = vpack.c.bf16 %v2133, %v2129
  %v2238 = vpack.c.bf16 %v2134, %v2130
  %v2239 = vpack.c.bf16 %v2139, %v2135
  %v2240 = vpack.c.bf16 %v2140, %v2136
  %v2241 = vpack.c.bf16 %v2141, %v2137
  %v2242 = vpack.c.bf16 %v2142, %v2138
  %v2243 = vpack.c.bf16 %v2147, %v2143
  %v2244 = vpack.c.bf16 %v2148, %v2144
  %v2245 = vpack.c.bf16 %v2149, %v2145
  %v2246 = vpack.c.bf16 %v2150, %v2146
  %v2247 = vpack.c.bf16 %v2155, %v2151
  %v2248 = vpack.c.bf16 %v2156, %v2152
  %v2249 = vpack.c.bf16 %v2157, %v2153
  %v2250 = vpack.c.bf16 %v2158, %v2154
  %v2251 = vpack.c.bf16 %v2163, %v2159
  %v2252 = vpack.c.bf16 %v2164, %v2160
  %v2253 = vpack.c.bf16 %v2165, %v2161
  %v2254 = vpack.c.bf16 %v2166, %v2162
  %v2255 = vpack.c.bf16 %v2171, %v2167
  %v2256 = vpack.c.bf16 %v2172, %v2168
  %v2257 = vpack.c.bf16 %v2173, %v2169
  %v2258 = vpack.c.bf16 %v2174, %v2170
  %v2259 = vpack.c.bf16 %v2179, %v2175
  %v2260 = vpack.c.bf16 %v2180, %v2176
  %v2261 = vpack.c.bf16 %v2181, %v2177
  %v2262 = vpack.c.bf16 %v2182, %v2178
  %v2263 = vpack.c.bf16 %v2187, %v2183
  %v2264 = vpack.c.bf16 %v2188, %v2184
  %v2265 = vpack.c.bf16 %v2189, %v2185
  %v2266 = vpack.c.bf16 %v2190, %v2186
  %v2267 = vpack.c.bf16 %v2195, %v2191
  %v2268 = vpack.c.bf16 %v2196, %v2192
  %v2269 = vpack.c.bf16 %v2197, %v2193
  %v2270 = vpack.c.bf16 %v2198, %v2194
  %v2271 = vpack.c.bf16 %v2203, %v2199
  %v2272 = vpack.c.bf16 %v2204, %v2200
  %v2273 = vpack.c.bf16 %v2205, %v2201
  %v2274 = vpack.c.bf16 %v2206, %v2202
  %v2275 = vpack.c.bf16 %v2211, %v2207
  %v2276 = vpack.c.bf16 %v2212, %v2208
  %v2277 = vpack.c.bf16 %v2213, %v2209
  %v2278 = vpack.c.bf16 %v2214, %v2210
  %v2279 = vld [vmem:[%s7] sm:$0xf]
  %v2280 = vld [vmem:[%s7 + $0x4] sm:$0xf]
  %v2281 = vld [vmem:[%s7 + $0x8] sm:$0xf]
  %v2282 = vld [vmem:[%s7 + $0xc] sm:$0xf]
  %v2283 = vld [vmem:[%s7 + $0x10] sm:$0xf]
  %v2284 = vld [vmem:[%s7 + $0x14] sm:$0xf]
  %v2285 = vld [vmem:[%s7 + $0x18] sm:$0xf]
  %v2286 = vld [vmem:[%s7 + $0x1c] sm:$0xf]
  %v2287 = vld [vmem:[%s7 + $0x20] sm:$0xf]
  %v2288 = vld [vmem:[%s7 + $0x24] sm:$0xf]
  %v2289 = vld [vmem:[%s7 + $0x28] sm:$0xf]
  %v2290 = vld [vmem:[%s7 + $0x2c] sm:$0xf]
  %v2291 = vld [vmem:[%s7 + $0x30] sm:$0xf]
  %v2292 = vld [vmem:[%s7 + $0x34] sm:$0xf]
  %v2293 = vld [vmem:[%s7 + $0x38] sm:$0xf]
  %v2294 = vld [vmem:[%s7 + $0x3c] sm:$0xf]
  %v2295 = vld [vmem:[%s7 + $0x40] sm:$0xf]
  %v2296 = vld [vmem:[%s7 + $0x44] sm:$0xf]
  %v2297 = vld [vmem:[%s7 + $0x48] sm:$0xf]
  %v2298 = vld [vmem:[%s7 + $0x4c] sm:$0xf]
  %v2299 = vld [vmem:[%s7 + $0x50] sm:$0xf]
  %v2300 = vld [vmem:[%s7 + $0x54] sm:$0xf]
  %v2301 = vld [vmem:[%s7 + $0x58] sm:$0xf]
  %v2302 = vld [vmem:[%s7 + $0x5c] sm:$0xf]
  %v2303 = vld [vmem:[%s7 + $0x60] sm:$0xf]
  %v2304 = vld [vmem:[%s7 + $0x64] sm:$0xf]
  %v2305 = vld [vmem:[%s7 + $0x68] sm:$0xf]
  %v2306 = vld [vmem:[%s7 + $0x6c] sm:$0xf]
  %v2307 = vld [vmem:[%s7 + $0x70] sm:$0xf]
  %v2308 = vld [vmem:[%s7 + $0x74] sm:$0xf]
  %v2309 = vld [vmem:[%s7 + $0x78] sm:$0xf]
  %v2310 = vld [vmem:[%s7 + $0x7c] sm:$0xf]
  %v2311 = vld [vmem:[%s7 + $0x80] sm:$0xf]
  %v2312 = vld [vmem:[%s7 + $0x84] sm:$0xf]
  %v2313 = vld [vmem:[%s7 + $0x88] sm:$0xf]
  %v2314 = vld [vmem:[%s7 + $0x8c] sm:$0xf]
  %v2315 = vld [vmem:[%s7 + $0x90] sm:$0xf]
  %v2316 = vld [vmem:[%s7 + $0x94] sm:$0xf]
  %v2317 = vld [vmem:[%s7 + $0x98] sm:$0xf]
  %v2318 = vld [vmem:[%s7 + $0x9c] sm:$0xf]
  %v2319 = vld [vmem:[%s7 + $0xa0] sm:$0xf]
  %v2320 = vld [vmem:[%s7 + $0xa4] sm:$0xf]
  %v2321 = vld [vmem:[%s7 + $0xa8] sm:$0xf]
  %v2322 = vld [vmem:[%s7 + $0xac] sm:$0xf]
  %v2323 = vld [vmem:[%s7 + $0xb0] sm:$0xf]
  %v2324 = vld [vmem:[%s7 + $0xb4] sm:$0xf]
  %v2325 = vld [vmem:[%s7 + $0xb8] sm:$0xf]
  %v2326 = vld [vmem:[%s7 + $0xbc] sm:$0xf]
  %v2327 = vld [vmem:[%s7 + $0xc0] sm:$0xf]
  %v2328 = vld [vmem:[%s7 + $0xc4] sm:$0xf]
  %v2329 = vld [vmem:[%s7 + $0xc8] sm:$0xf]
  %v2330 = vld [vmem:[%s7 + $0xcc] sm:$0xf]
  %v2331 = vld [vmem:[%s7 + $0xd0] sm:$0xf]
  %v2332 = vld [vmem:[%s7 + $0xd4] sm:$0xf]
  %v2333 = vld [vmem:[%s7 + $0xd8] sm:$0xf]
  %v2334 = vld [vmem:[%s7 + $0xdc] sm:$0xf]
  %v2335 = vld [vmem:[%s7 + $0xe0] sm:$0xf]
  %v2336 = vld [vmem:[%s7 + $0xe4] sm:$0xf]
  %v2337 = vld [vmem:[%s7 + $0xe8] sm:$0xf]
  %v2338 = vld [vmem:[%s7 + $0xec] sm:$0xf]
  %v2339 = vld [vmem:[%s7 + $0xf0] sm:$0xf]
  %v2340 = vld [vmem:[%s7 + $0xf4] sm:$0xf]
  %v2341 = vld [vmem:[%s7 + $0xf8] sm:$0xf]
  %v2342 = vld [vmem:[%s7 + $0xfc] sm:$0xf]
  %v2343 = vlaneseq
  %v2344 = vshrl.u32 %v2343, 7
  %v2345 = vsub.s32 4, %v2344
  %v2346 = vrot.slane %v35, %v2345
  %v2411 = vunpack.c.l.b16 %v2279
  %v2412 = vunpack.c.l.b16 %v2280
  %v2413 = vunpack.c.l.b16 %v2281
  %v2414 = vunpack.c.l.b16 %v2282
  %v2415 = vunpack.c.l.b16 %v2283
  %v2416 = vunpack.c.l.b16 %v2284
  %v2417 = vunpack.c.l.b16 %v2285
  %v2418 = vunpack.c.l.b16 %v2286
  %v2419 = vunpack.c.l.b16 %v2287
  %v2420 = vunpack.c.l.b16 %v2288
  %v2421 = vunpack.c.l.b16 %v2289
  %v2422 = vunpack.c.l.b16 %v2290
  %v2423 = vunpack.c.l.b16 %v2291
  %v2424 = vunpack.c.l.b16 %v2292
  %v2425 = vunpack.c.l.b16 %v2293
  %v2426 = vunpack.c.l.b16 %v2294
  %v2427 = vunpack.c.l.b16 %v2295
  %v2428 = vunpack.c.l.b16 %v2296
  %v2429 = vunpack.c.l.b16 %v2297
  %v2430 = vunpack.c.l.b16 %v2298
  %v2431 = vunpack.c.l.b16 %v2299
  %v2432 = vunpack.c.l.b16 %v2300
  %v2433 = vunpack.c.l.b16 %v2301
  %v2434 = vunpack.c.l.b16 %v2302
  %v2435 = vunpack.c.l.b16 %v2303
  %v2436 = vunpack.c.l.b16 %v2304
  %v2437 = vunpack.c.l.b16 %v2305
  %v2438 = vunpack.c.l.b16 %v2306
  %v2439 = vunpack.c.l.b16 %v2307
  %v2440 = vunpack.c.l.b16 %v2308
  %v2441 = vunpack.c.l.b16 %v2309
  %v2442 = vunpack.c.l.b16 %v2310
  %v2443 = vunpack.c.l.b16 %v2311
  %v2444 = vunpack.c.l.b16 %v2312
  %v2445 = vunpack.c.l.b16 %v2313
  %v2446 = vunpack.c.l.b16 %v2314
  %v2447 = vunpack.c.l.b16 %v2315
  %v2448 = vunpack.c.l.b16 %v2316
  %v2449 = vunpack.c.l.b16 %v2317
  %v2450 = vunpack.c.l.b16 %v2318
  %v2451 = vunpack.c.l.b16 %v2319
  %v2452 = vunpack.c.l.b16 %v2320
  %v2453 = vunpack.c.l.b16 %v2321
  %v2454 = vunpack.c.l.b16 %v2322
  %v2455 = vunpack.c.l.b16 %v2323
  %v2456 = vunpack.c.l.b16 %v2324
  %v2457 = vunpack.c.l.b16 %v2325
  %v2458 = vunpack.c.l.b16 %v2326
  %v2459 = vunpack.c.l.b16 %v2327
  %v2460 = vunpack.c.l.b16 %v2328
  %v2461 = vunpack.c.l.b16 %v2329
  %v2462 = vunpack.c.l.b16 %v2330
  %v2463 = vunpack.c.l.b16 %v2331
  %v2464 = vunpack.c.l.b16 %v2332
  %v2465 = vunpack.c.l.b16 %v2333
  %v2466 = vunpack.c.l.b16 %v2334
  %v2467 = vunpack.c.l.b16 %v2335
  %v2468 = vunpack.c.l.b16 %v2336
  %v2469 = vunpack.c.l.b16 %v2337
  %v2470 = vunpack.c.l.b16 %v2338
  %v2471 = vunpack.c.l.b16 %v2339
  %v2472 = vunpack.c.l.b16 %v2340
  %v2473 = vunpack.c.l.b16 %v2341
  %v2474 = vunpack.c.l.b16 %v2342
  %v2475 = vpack.c.b16 %v2412, %v2411
  %v2476 = vpack.c.b16 %v2414, %v2413
  %v2477 = vpack.c.b16 %v2416, %v2415
  %v2478 = vpack.c.b16 %v2418, %v2417
  %v2479 = vpack.c.b16 %v2420, %v2419
  %v2480 = vpack.c.b16 %v2422, %v2421
  %v2481 = vpack.c.b16 %v2424, %v2423
  %v2482 = vpack.c.b16 %v2426, %v2425
  %v2483 = vpack.c.b16 %v2428, %v2427
  %v2484 = vpack.c.b16 %v2430, %v2429
  %v2485 = vpack.c.b16 %v2432, %v2431
  %v2486 = vpack.c.b16 %v2434, %v2433
  %v2487 = vpack.c.b16 %v2436, %v2435
  %v2488 = vpack.c.b16 %v2438, %v2437
  %v2489 = vpack.c.b16 %v2440, %v2439
  %v2490 = vpack.c.b16 %v2442, %v2441
  %v2491 = vpack.c.b16 %v2444, %v2443
  %v2492 = vpack.c.b16 %v2446, %v2445
  %v2493 = vpack.c.b16 %v2448, %v2447
  %v2494 = vpack.c.b16 %v2450, %v2449
  %v2495 = vpack.c.b16 %v2452, %v2451
  %v2496 = vpack.c.b16 %v2454, %v2453
  %v2497 = vpack.c.b16 %v2456, %v2455
  %v2498 = vpack.c.b16 %v2458, %v2457
  %v2499 = vpack.c.b16 %v2460, %v2459
  %v2500 = vpack.c.b16 %v2462, %v2461
  %v2501 = vpack.c.b16 %v2464, %v2463
  %v2502 = vpack.c.b16 %v2466, %v2465
  %v2503 = vpack.c.b16 %v2468, %v2467
  %v2504 = vpack.c.b16 %v2470, %v2469
  %v2505 = vpack.c.b16 %v2472, %v2471
  %v2506 = vpack.c.b16 %v2474, %v2473
  %2539 = vmatprep.subr.bf16.mxu0 0
  %2540 = vmatpush1.bf16.msra.mxu0 %v2482
  %2541 = vmatprep.subr.bf16.mxu0 0
  %2542 = vmatpush1.bf16.msra.mxu0 %v2481
  %2543 = vmatprep.subr.bf16.mxu0 0
  %2544 = vmatpush1.bf16.msra.mxu0 %v2480
  %2545 = vmatprep.subr.bf16.mxu0 0
  %2546 = vmatpush1.bf16.msra.mxu0 %v2479
  %2547 = vmatprep.subr.bf16.mxu0 0
  %2548 = vmatpush1.bf16.msra.mxu0 %v2478
  %2549 = vmatprep.subr.bf16.mxu0 0
  %2550 = vmatpush1.bf16.msra.mxu0 %v2477
  %2551 = vmatprep.subr.bf16.mxu0 0
  %2552 = vmatpush1.bf16.msra.mxu0 %v2476
  %2553 = vmatprep.subr.bf16.mxu0 0
  %2554 = vmatpush1.bf16.msra.mxu0 %v2475
  %2555 = vmatprep.subr.bf16.mxu0 0
  %2556 = vmatpush2.bf16.msra.mxu0 %v2490
  %2557 = vmatprep.subr.bf16.mxu0 0
  %2558 = vmatpush2.bf16.msra.mxu0 %v2489
  %2559 = vmatprep.subr.bf16.mxu0 0
  %2560 = vmatpush2.bf16.msra.mxu0 %v2488
  %2561 = vmatprep.subr.bf16.mxu0 0
  %2562 = vmatpush2.bf16.msra.mxu0 %v2487
  %2563 = vmatprep.subr.bf16.mxu0 0
  %2564 = vmatpush2.bf16.msra.mxu0 %v2486
  %2565 = vmatprep.subr.bf16.mxu0 0
  %2566 = vmatpush2.bf16.msra.mxu0 %v2485
  %2567 = vmatprep.subr.bf16.mxu0 0
  %2568 = vmatpush2.bf16.msra.mxu0 %v2484
  %2569 = vmatprep.subr.bf16.mxu0 0
  %2570 = vmatpush2.bf16.msra.mxu0 %v2483
  %2571 = vmatprep.mubr.bf16.mxu0 %v2216
  %2572 = vmatmul.mubr.bf16.gmra.mxu0 %v2215
  %v2573 = vpop.f32.mrf.mxu0
  %v2574 = vadd.f32 %v2346, %v2573
  %v2575 = vpop.f32.mrf.mxu0
  %v2576 = vpop.f32.mrf.mxu0
  %v2577 = vadd.f32 %v2346, %v2576
  %v2578 = vpop.f32.mrf.mxu0
  %2579 = vmatprep.mubr.bf16.mxu0 %v2220
  %2580 = vmatmul.mubr.bf16.gmra.mxu0 %v2219
  %v2581 = vpop.f32.mrf.mxu0
  %v2582 = vadd.f32 %v2346, %v2581
  %v2583 = vpop.f32.mrf.mxu0
  %v2584 = vpop.f32.mrf.mxu0
  %v2585 = vadd.f32 %v2346, %v2584
  %v2586 = vpop.f32.mrf.mxu0
  %2587 = vmatprep.mubr.bf16.mxu0 %v2224
  %2588 = vmatmul.mubr.bf16.gmra.mxu0 %v2223
  %v2589 = vpop.f32.mrf.mxu0
  %v2590 = vadd.f32 %v2346, %v2589
  %v2591 = vpop.f32.mrf.mxu0
  %v2592 = vpop.f32.mrf.mxu0
  %v2593 = vadd.f32 %v2346, %v2592
  %v2594 = vpop.f32.mrf.mxu0
  %2595 = vmatprep.mubr.bf16.mxu0 %v2228
  %2596 = vmatmul.mubr.bf16.gmra.mxu0 %v2227
  %v2597 = vpop.f32.mrf.mxu0
  %v2598 = vadd.f32 %v2346, %v2597
  %v2599 = vpop.f32.mrf.mxu0
  %v2600 = vpop.f32.mrf.mxu0
  %v2601 = vadd.f32 %v2346, %v2600
  %v2602 = vpop.f32.mrf.mxu0
  %2603 = vmatprep.mubr.bf16.mxu0 %v2232
  %2604 = vmatmul.mubr.bf16.gmra.mxu0 %v2231
  %v2605 = vpop.f32.mrf.mxu0
  %v2606 = vadd.f32 %v2346, %v2605
  %v2607 = vpop.f32.mrf.mxu0
  %v2608 = vpop.f32.mrf.mxu0
  %v2609 = vadd.f32 %v2346, %v2608
  %v2610 = vpop.f32.mrf.mxu0
  %2611 = vmatprep.mubr.bf16.mxu0 %v2236
  %2612 = vmatmul.mubr.bf16.gmra.mxu0 %v2235
  %v2613 = vpop.f32.mrf.mxu0
  %v2614 = vadd.f32 %v2346, %v2613
  %v2615 = vpop.f32.mrf.mxu0
  %v2616 = vpop.f32.mrf.mxu0
  %v2617 = vadd.f32 %v2346, %v2616
  %v2618 = vpop.f32.mrf.mxu0
  %2619 = vmatprep.mubr.bf16.mxu0 %v2240
  %2620 = vmatmul.mubr.bf16.gmra.mxu0 %v2239
  %v2621 = vpop.f32.mrf.mxu0
  %v2622 = vadd.f32 %v2346, %v2621
  %v2623 = vpop.f32.mrf.mxu0
  %v2624 = vpop.f32.mrf.mxu0
  %v2625 = vadd.f32 %v2346, %v2624
  %v2626 = vpop.f32.mrf.mxu0
  %2627 = vmatprep.mubr.bf16.mxu0 %v2244
  %2628 = vmatmul.mubr.bf16.gmra.mxu0 %v2243
  %v2629 = vpop.f32.mrf.mxu0
  %v2630 = vadd.f32 %v2346, %v2629
  %v2631 = vpop.f32.mrf.mxu0
  %v2632 = vpop.f32.mrf.mxu0
  %v2633 = vadd.f32 %v2346, %v2632
  %v2634 = vpop.f32.mrf.mxu0
  %2635 = vmatprep.mubr.bf16.mxu0 %v2248
  %2636 = vmatmul.mubr.bf16.gmra.mxu0 %v2247
  %v2637 = vpop.f32.mrf.mxu0
  %v2638 = vadd.f32 %v2346, %v2637
  %v2639 = vpop.f32.mrf.mxu0
  %v2640 = vpop.f32.mrf.mxu0
  %v2641 = vadd.f32 %v2346, %v2640
  %v2642 = vpop.f32.mrf.mxu0
  %2643 = vmatprep.mubr.bf16.mxu0 %v2252
  %2644 = vmatmul.mubr.bf16.gmra.mxu0 %v2251
  %v2645 = vpop.f32.mrf.mxu0
  %v2646 = vadd.f32 %v2346, %v2645
  %v2647 = vpop.f32.mrf.mxu0
  %v2648 = vpop.f32.mrf.mxu0
  %v2649 = vadd.f32 %v2346, %v2648
  %v2650 = vpop.f32.mrf.mxu0
  %2651 = vmatprep.mubr.bf16.mxu0 %v2256
  %2652 = vmatmul.mubr.bf16.gmra.mxu0 %v2255
  %v2653 = vpop.f32.mrf.mxu0
  %v2654 = vadd.f32 %v2346, %v2653
  %v2655 = vpop.f32.mrf.mxu0
  %v2656 = vpop.f32.mrf.mxu0
  %v2657 = vadd.f32 %v2346, %v2656
  %v2658 = vpop.f32.mrf.mxu0
  %2659 = vmatprep.mubr.bf16.mxu0 %v2260
  %2660 = vmatmul.mubr.bf16.gmra.mxu0 %v2259
  %v2661 = vpop.f32.mrf.mxu0
  %v2662 = vadd.f32 %v2346, %v2661
  %v2663 = vpop.f32.mrf.mxu0
  %v2664 = vpop.f32.mrf.mxu0
  %v2665 = vadd.f32 %v2346, %v2664
  %v2666 = vpop.f32.mrf.mxu0
  %2667 = vmatprep.mubr.bf16.mxu0 %v2264
  %2668 = vmatmul.mubr.bf16.gmra.mxu0 %v2263
  %v2669 = vpop.f32.mrf.mxu0
  %v2670 = vadd.f32 %v2346, %v2669
  %v2671 = vpop.f32.mrf.mxu0
  %v2672 = vpop.f32.mrf.mxu0
  %v2673 = vadd.f32 %v2346, %v2672
  %v2674 = vpop.f32.mrf.mxu0
  %2675 = vmatprep.mubr.bf16.mxu0 %v2268
  %2676 = vmatmul.mubr.bf16.gmra.mxu0 %v2267
  %v2677 = vpop.f32.mrf.mxu0
  %v2678 = vadd.f32 %v2346, %v2677
  %v2679 = vpop.f32.mrf.mxu0
  %v2680 = vpop.f32.mrf.mxu0
  %v2681 = vadd.f32 %v2346, %v2680
  %v2682 = vpop.f32.mrf.mxu0
  %2683 = vmatprep.mubr.bf16.mxu0 %v2272
  %2684 = vmatmul.mubr.bf16.gmra.mxu0 %v2271
  %v2685 = vpop.f32.mrf.mxu0
  %v2686 = vadd.f32 %v2346, %v2685
  %v2687 = vpop.f32.mrf.mxu0
  %v2688 = vpop.f32.mrf.mxu0
  %v2689 = vadd.f32 %v2346, %v2688
  %v2690 = vpop.f32.mrf.mxu0
  %2691 = vmatprep.mubr.bf16.mxu0 %v2276
  %2692 = vmatmul.mubr.bf16.gmra.mxu0 %v2275
  %v2693 = vpop.f32.mrf.mxu0
  %v2694 = vadd.f32 %v2346, %v2693
  %v2695 = vpop.f32.mrf.mxu0
  %v2696 = vpop.f32.mrf.mxu0
  %v2697 = vadd.f32 %v2346, %v2696
  %v2698 = vpop.f32.mrf.mxu0
  %2699 = vdwg.mxu0
  %2700 = vmatprep.subr.bf16.mxu0 0
  %2701 = vmatpush1.bf16.msra.mxu0 %v2498
  %2702 = vmatprep.subr.bf16.mxu0 0
  %2703 = vmatpush1.bf16.msra.mxu0 %v2497
  %2704 = vmatprep.subr.bf16.mxu0 0
  %2705 = vmatpush1.bf16.msra.mxu0 %v2496
  %2706 = vmatprep.subr.bf16.mxu0 0
  %2707 = vmatpush1.bf16.msra.mxu0 %v2495
  %2708 = vmatprep.subr.bf16.mxu0 0
  %2709 = vmatpush1.bf16.msra.mxu0 %v2494
  %2710 = vmatprep.subr.bf16.mxu0 0
  %2711 = vmatpush1.bf16.msra.mxu0 %v2493
  %2712 = vmatprep.subr.bf16.mxu0 0
  %2713 = vmatpush1.bf16.msra.mxu0 %v2492
  %2714 = vmatprep.subr.bf16.mxu0 0
  %2715 = vmatpush1.bf16.msra.mxu0 %v2491
  %2716 = vmatprep.subr.bf16.mxu0 0
  %2717 = vmatpush2.bf16.msra.mxu0 %v2506
  %2718 = vmatprep.subr.bf16.mxu0 0
  %2719 = vmatpush2.bf16.msra.mxu0 %v2505
  %2720 = vmatprep.subr.bf16.mxu0 0
  %2721 = vmatpush2.bf16.msra.mxu0 %v2504
  %2722 = vmatprep.subr.bf16.mxu0 0
  %2723 = vmatpush2.bf16.msra.mxu0 %v2503
  %2724 = vmatprep.subr.bf16.mxu0 0
  %2725 = vmatpush2.bf16.msra.mxu0 %v2502
  %2726 = vmatprep.subr.bf16.mxu0 0
  %2727 = vmatpush2.bf16.msra.mxu0 %v2501
  %2728 = vmatprep.subr.bf16.mxu0 0
  %2729 = vmatpush2.bf16.msra.mxu0 %v2500
  %2730 = vmatprep.subr.bf16.mxu0 0
  %2731 = vmatpush2.bf16.msra.mxu0 %v2499
  %2732 = vmatprep.mubr.bf16.mxu0 %v2218
  %2733 = vmatmul.mubr.bf16.gmra.mxu0 %v2217
  %v2734 = vpop.f32.mrf.mxu0
  %v2735 = vadd.f32 %v2574, %v2734
  %v2736 = vpop.f32.mrf.mxu0
  %v2737 = vpop.f32.mrf.mxu0
  %v2738 = vadd.f32 %v2577, %v2737
  %v2739 = vpop.f32.mrf.mxu0
  %2740 = vmatprep.mubr.bf16.mxu0 %v2222
  %2741 = vmatmul.mubr.bf16.gmra.mxu0 %v2221
  %v2742 = vpop.f32.mrf.mxu0
  %v2743 = vadd.f32 %v2582, %v2742
  %v2744 = vpop.f32.mrf.mxu0
  %v2745 = vpop.f32.mrf.mxu0
  %v2746 = vadd.f32 %v2585, %v2745
  %v2747 = vpop.f32.mrf.mxu0
  %2748 = vmatprep.mubr.bf16.mxu0 %v2226
  %2749 = vmatmul.mubr.bf16.gmra.mxu0 %v2225
  %v2750 = vpop.f32.mrf.mxu0
  %v2751 = vadd.f32 %v2590, %v2750
  %v2752 = vpop.f32.mrf.mxu0
  %v2753 = vpop.f32.mrf.mxu0
  %v2754 = vadd.f32 %v2593, %v2753
  %v2755 = vpop.f32.mrf.mxu0
  %2756 = vmatprep.mubr.bf16.mxu0 %v2230
  %2757 = vmatmul.mubr.bf16.gmra.mxu0 %v2229
  %v2758 = vpop.f32.mrf.mxu0
  %v2759 = vadd.f32 %v2598, %v2758
  %v2760 = vpop.f32.mrf.mxu0
  %v2761 = vpop.f32.mrf.mxu0
  %v2762 = vadd.f32 %v2601, %v2761
  %v2763 = vpop.f32.mrf.mxu0
  %2764 = vmatprep.mubr.bf16.mxu0 %v2234
  %2765 = vmatmul.mubr.bf16.gmra.mxu0 %v2233
  %v2766 = vpop.f32.mrf.mxu0
  %v2767 = vadd.f32 %v2606, %v2766
  %v2768 = vpop.f32.mrf.mxu0
  %v2769 = vpop.f32.mrf.mxu0
  %v2770 = vadd.f32 %v2609, %v2769
  %v2771 = vpop.f32.mrf.mxu0
  %2772 = vmatprep.mubr.bf16.mxu0 %v2238
  %2773 = vmatmul.mubr.bf16.gmra.mxu0 %v2237
  %v2774 = vpop.f32.mrf.mxu0
  %v2775 = vadd.f32 %v2614, %v2774
  %v2776 = vpop.f32.mrf.mxu0
  %v2777 = vpop.f32.mrf.mxu0
  %v2778 = vadd.f32 %v2617, %v2777
  %v2779 = vpop.f32.mrf.mxu0
  %2780 = vmatprep.mubr.bf16.mxu0 %v2242
  %2781 = vmatmul.mubr.bf16.gmra.mxu0 %v2241
  %v2782 = vpop.f32.mrf.mxu0
  %v2783 = vadd.f32 %v2622, %v2782
  %v2784 = vpop.f32.mrf.mxu0
  %v2785 = vpop.f32.mrf.mxu0
  %v2786 = vadd.f32 %v2625, %v2785
  %v2787 = vpop.f32.mrf.mxu0
  %2788 = vmatprep.mubr.bf16.mxu0 %v2246
  %2789 = vmatmul.mubr.bf16.gmra.mxu0 %v2245
  %v2790 = vpop.f32.mrf.mxu0
  %v2791 = vadd.f32 %v2630, %v2790
  %v2792 = vpop.f32.mrf.mxu0
  %v2793 = vpop.f32.mrf.mxu0
  %v2794 = vadd.f32 %v2633, %v2793
  %v2795 = vpop.f32.mrf.mxu0
  %2796 = vmatprep.mubr.bf16.mxu0 %v2250
  %2797 = vmatmul.mubr.bf16.gmra.mxu0 %v2249
  %v2798 = vpop.f32.mrf.mxu0
  %v2799 = vadd.f32 %v2638, %v2798
  %v2800 = vpop.f32.mrf.mxu0
  %v2801 = vpop.f32.mrf.mxu0
  %v2802 = vadd.f32 %v2641, %v2801
  %v2803 = vpop.f32.mrf.mxu0
  %2804 = vmatprep.mubr.bf16.mxu0 %v2254
  %2805 = vmatmul.mubr.bf16.gmra.mxu0 %v2253
  %v2806 = vpop.f32.mrf.mxu0
  %v2807 = vadd.f32 %v2646, %v2806
  %v2808 = vpop.f32.mrf.mxu0
  %v2809 = vpop.f32.mrf.mxu0
  %v2810 = vadd.f32 %v2649, %v2809
  %v2811 = vpop.f32.mrf.mxu0
  %2812 = vmatprep.mubr.bf16.mxu0 %v2258
  %2813 = vmatmul.mubr.bf16.gmra.mxu0 %v2257
  %v2814 = vpop.f32.mrf.mxu0
  %v2815 = vadd.f32 %v2654, %v2814
  %v2816 = vpop.f32.mrf.mxu0
  %v2817 = vpop.f32.mrf.mxu0
  %v2818 = vadd.f32 %v2657, %v2817
  %v2819 = vpop.f32.mrf.mxu0
  %2820 = vmatprep.mubr.bf16.mxu0 %v2262
  %2821 = vmatmul.mubr.bf16.gmra.mxu0 %v2261
  %v2822 = vpop.f32.mrf.mxu0
  %v2823 = vadd.f32 %v2662, %v2822
  %v2824 = vpop.f32.mrf.mxu0
  %v2825 = vpop.f32.mrf.mxu0
  %v2826 = vadd.f32 %v2665, %v2825
  %v2827 = vpop.f32.mrf.mxu0
  %2828 = vmatprep.mubr.bf16.mxu0 %v2266
  %2829 = vmatmul.mubr.bf16.gmra.mxu0 %v2265
  %v2830 = vpop.f32.mrf.mxu0
  %v2831 = vadd.f32 %v2670, %v2830
  %v2832 = vpop.f32.mrf.mxu0
  %v2833 = vpop.f32.mrf.mxu0
  %v2834 = vadd.f32 %v2673, %v2833
  %v2835 = vpop.f32.mrf.mxu0
  %2836 = vmatprep.mubr.bf16.mxu0 %v2270
  %2837 = vmatmul.mubr.bf16.gmra.mxu0 %v2269
  %v2838 = vpop.f32.mrf.mxu0
  %v2839 = vadd.f32 %v2678, %v2838
  %v2840 = vpop.f32.mrf.mxu0
  %v2841 = vpop.f32.mrf.mxu0
  %v2842 = vadd.f32 %v2681, %v2841
  %v2843 = vpop.f32.mrf.mxu0
  %2844 = vmatprep.mubr.bf16.mxu0 %v2274
  %2845 = vmatmul.mubr.bf16.gmra.mxu0 %v2273
  %v2846 = vpop.f32.mrf.mxu0
  %v2847 = vadd.f32 %v2686, %v2846
  %v2848 = vpop.f32.mrf.mxu0
  %v2849 = vpop.f32.mrf.mxu0
  %v2850 = vadd.f32 %v2689, %v2849
  %v2851 = vpop.f32.mrf.mxu0
  %2852 = vmatprep.mubr.bf16.mxu0 %v2278
  %2853 = vmatmul.mubr.bf16.gmra.mxu0 %v2277
  %v2854 = vpop.f32.mrf.mxu0
  %v2855 = vadd.f32 %v2694, %v2854
  %v2856 = vpop.f32.mrf.mxu0
  %v2857 = vpop.f32.mrf.mxu0
  %v2858 = vadd.f32 %v2697, %v2857
  %v2859 = vpop.f32.mrf.mxu0
  %2860 = vdwg.mxu0
  %v2861 = vtanh.pop %v2735
  %v2862 = vtanh.pop %v2738
  %v2863 = vtanh.pop %v2743
  %v2864 = vtanh.pop %v2746
  %v2865 = vtanh.pop %v2751
  %v2866 = vtanh.pop %v2754
  %v2867 = vtanh.pop %v2759
  %v2868 = vtanh.pop %v2762
  %v2869 = vtanh.pop %v2767
  %v2870 = vtanh.pop %v2770
  %v2871 = vtanh.pop %v2775
  %v2872 = vtanh.pop %v2778
  %v2873 = vtanh.pop %v2783
  %v2874 = vtanh.pop %v2786
  %v2875 = vtanh.pop %v2791
  %v2876 = vtanh.pop %v2794
  %v2877 = vtanh.pop %v2799
  %v2878 = vtanh.pop %v2802
  %v2879 = vtanh.pop %v2807
  %v2880 = vtanh.pop %v2810
  %v2881 = vtanh.pop %v2815
  %v2882 = vtanh.pop %v2818
  %v2883 = vtanh.pop %v2823
  %v2884 = vtanh.pop %v2826
  %v2885 = vtanh.pop %v2831
  %v2886 = vtanh.pop %v2834
  %v2887 = vtanh.pop %v2839
  %v2888 = vtanh.pop %v2842
  %v2889 = vtanh.pop %v2847
  %v2890 = vtanh.pop %v2850
  %v2891 = vtanh.pop %v2855
  %v2892 = vtanh.pop %v2858
  %vm2893 = vcmask 392192
  %2894 = vst.msk [vmem:[%s10] sm:$0xff] %vm2893, %v2861
  %2895 = vst.msk [vmem:[%s10 + $0x8] sm:$0xff] %vm2893, %v2862
  %2896 = vst.msk [vmem:[%s10 + $0x10] sm:$0xff] %vm2893, %v2863
  %2897 = vst.msk [vmem:[%s10 + $0x18] sm:$0xff] %vm2893, %v2864
  %2898 = vst.msk [vmem:[%s10 + $0x20] sm:$0xff] %vm2893, %v2865
  %2899 = vst.msk [vmem:[%s10 + $0x28] sm:$0xff] %vm2893, %v2866
  %2900 = vst.msk [vmem:[%s10 + $0x30] sm:$0xff] %vm2893, %v2867
  %2901 = vst.msk [vmem:[%s10 + $0x38] sm:$0xff] %vm2893, %v2868
  %2902 = vst.msk [vmem:[%s10 + $0x40] sm:$0xff] %vm2893, %v2869
  %2903 = vst.msk [vmem:[%s10 + $0x48] sm:$0xff] %vm2893, %v2870
  %2904 = vst.msk [vmem:[%s10 + $0x50] sm:$0xff] %vm2893, %v2871
  %2905 = vst.msk [vmem:[%s10 + $0x58] sm:$0xff] %vm2893, %v2872
  %2906 = vst.msk [vmem:[%s10 + $0x60] sm:$0xff] %vm2893, %v2873
  %2907 = vst.msk [vmem:[%s10 + $0x68] sm:$0xff] %vm2893, %v2874
  %2908 = vst.msk [vmem:[%s10 + $0x70] sm:$0xff] %vm2893, %v2875
  %2909 = vst.msk [vmem:[%s10 + $0x78] sm:$0xff] %vm2893, %v2876
  %2910 = vst.msk [vmem:[%s10 + $0x80] sm:$0xff] %vm2893, %v2877
  %2911 = vst.msk [vmem:[%s10 + $0x88] sm:$0xff] %vm2893, %v2878
  %2912 = vst.msk [vmem:[%s10 + $0x90] sm:$0xff] %vm2893, %v2879
  %2913 = vst.msk [vmem:[%s10 + $0x98] sm:$0xff] %vm2893, %v2880
  %2914 = vst.msk [vmem:[%s10 + $0xa0] sm:$0xff] %vm2893, %v2881
  %2915 = vst.msk [vmem:[%s10 + $0xa8] sm:$0xff] %vm2893, %v2882
  %2916 = vst.msk [vmem:[%s10 + $0xb0] sm:$0xff] %vm2893, %v2883
  %2917 = vst.msk [vmem:[%s10 + $0xb8] sm:$0xff] %vm2893, %v2884
  %2918 = vst.msk [vmem:[%s10 + $0xc0] sm:$0xff] %vm2893, %v2885
  %2919 = vst.msk [vmem:[%s10 + $0xc8] sm:$0xff] %vm2893, %v2886
  %2920 = vst.msk [vmem:[%s10 + $0xd0] sm:$0xff] %vm2893, %v2887
  %2921 = vst.msk [vmem:[%s10 + $0xd8] sm:$0xff] %vm2893, %v2888
  %2922 = vst.msk [vmem:[%s10 + $0xe0] sm:$0xff] %vm2893, %v2889
  %2923 = vst.msk [vmem:[%s10 + $0xe8] sm:$0xff] %vm2893, %v2890
  %2924 = vst.msk [vmem:[%s10 + $0xf0] sm:$0xff] %vm2893, %v2891
  %2925 = vst.msk [vmem:[%s10 + $0xf8] sm:$0xff] %vm2893, %v2892
  // Predicated region
  $region38: #{generator_forward.1} parent=0 // pred_check
    _
  $region39: #{generator_forward.1} parent=0 // pred_check_branch
    %2927 = sbr.rel (0) target = $region41
  $region40: #{generator_forward.1} parent=0 // pred_region
    _
  $region41: #{generator_forward.1} parent=0 // pred_fallthru
    _
  // Predicated region
  $region42: #{generator_forward.1} parent=0 // pred_check
    _
  $region43: #{generator_forward.1} parent=0 // pred_check_branch
    %2929 = sbr.rel (0) target = $region45
  $region44: #{generator_forward.1} parent=0 // pred_region
    _
  $region45: #{generator_forward.1} parent=0 // pred_fallthru
    _
  // Predicated region
  $region46: #{generator_forward.1} parent=0 // pred_check
    _
  $region47: #{generator_forward.1} parent=0 // pred_check_branch
    %2931 = sbr.rel (0) target = $region49
  $region48: #{generator_forward.1} parent=0 // pred_region
    _
  $region49: #{generator_forward.1} parent=0 // pred_fallthru
    _
  // Predicated region
  $region50: #{generator_forward.1} parent=0 // pred_check
    _
  $region51: #{generator_forward.1} parent=0 // pred_check_branch
    %2933 = sbr.rel (0) target = $region53
  $region52: #{generator_forward.1} parent=0 // pred_region
    _
  $region53: #{generator_forward.1} parent=0 // pred_fallthru
    _

</llo_original>
